<compile_context>
chip_gen: v6e
topology: v6e:2x2x1
jax: 0.10.0
libtpu: 0.0.40
codegen_flags: <defaults>
</compile_context>

<pallas_src>
import functools

import jax
import jax.numpy as jnp
from jax import lax
from jax.experimental import pallas as pl
from jax.experimental.pallas import tpu as pltpu

EPS = 1e-5


# ----------------------------------------------------------------------------
# Fused BNeck kernel: one program per group of B images.
#   x_ref    : (Cin, B*HW)  f32   input slab (channels-first, batch on lanes)
#   w1_ref   : (E, Cin)     bf16  1x1 expand weights (BN folded)
#   b1_ref   : (E, 1)       f32   expand bias (folded BN shift)
#   wd_ref   : (K*K, E, 1)  f32   depthwise taps (BN folded)
#   b2_ref   : (E, 1)       f32   depthwise bias
#   mask_ref : (K*K, B*HW)  f32   combined row+col validity mask per tap
#   wfc1_ref : (r, E)       bf16  SE fc1 weights
#   wfc2_ref : (E, r)       bf16  SE fc2 weights
#   pool_ref : (B*HW, B)    bf16  block mean-pool matrix (1/HW per image block)
#   bcast_ref: (B, B*HW)    bf16  block broadcast matrix (ones per image block)
#   w3_ref   : (Cout, E)    bf16  1x1 project weights (BN folded)
#   b3_ref   : (Cout, 1)    f32   project bias
#   o_ref    : (Cout, B*HW) f32   output slab
# ----------------------------------------------------------------------------
def _bneck_kernel(x_ref, w1_ref, b1_ref, wd_ref, b2_ref, mask_ref,
                  wfc1_ref, wfc2_ref, pool_ref, bcast_ref, w3_ref, b3_ref,
                  o_ref, *, K, W, HW, B, se, add):
    p = K // 2
    n = B * HW
    x = x_ref[...]                                          # (Cin, n) f32

    # 1) 1x1 expand conv (BN folded) + ReLU.  bf16 operands, f32 accumulate.
    x1 = jnp.dot(w1_ref[...], x.astype(jnp.bfloat16),
                 preferred_element_type=jnp.float32)
    x1 = jnp.maximum(x1 + b1_ref[...], 0.0)                 # (E, n) f32

    # 2) depthwise KxK conv (stride 1, SAME): pltpu.roll + precomputed masks.
    #    The mask zeroes every tap whose source pixel lies outside the image
    #    (top/bottom rows, left/right cols), which also covers any roll that
    #    would wrap into a neighbouring image folded into the lane axis.
    wd = wd_ref[...]                                        # (K*K, E, 1)
    mask = mask_ref[...]                                    # (K*K, n)
    acc = jnp.zeros_like(x1)
    for ki in range(K):
        for kj in range(K):
            t = ki * K + kj
            delta = (ki - p) * W + (kj - p)
            if delta == 0:                                  # centre tap: no
                acc = acc + x1 * wd[t]                      # roll, no mask
            else:
                patch = pltpu.roll(x1, shift=(-delta) % n, axis=1)
                acc = acc + patch * wd[t] * mask[t:t + 1, :]
    x2 = jnp.maximum(acc + b2_ref[...], 0.0)                # (E, n) f32

    # 3) squeeze-excite, fully in-register, B lane columns through the chain:
    #    pool (matmul) -> fc1/ReLU -> fc2/hardsigmoid -> lane-dense broadcast.
    if se:
        pooled = jnp.dot(x2.astype(jnp.bfloat16), pool_ref[...],
                         preferred_element_type=jnp.float32)          # (E, B)
        h = jnp.maximum(
            jnp.dot(wfc1_ref[...], pooled.astype(jnp.bfloat16),
                    preferred_element_type=jnp.float32), 0.0)         # (r, B)
        f = jnp.dot(wfc2_ref[...], h.astype(jnp.bfloat16),
                    preferred_element_type=jnp.float32)               # (E, B)
        scale = jnp.clip((f + 3.0) / 6.0, 0.0, 1.0)                   # (E, B)
        scale_full = jnp.dot(scale.astype(jnp.bfloat16), bcast_ref[...],
                             preferred_element_type=jnp.float32)      # (E, n)
        x2 = x2 * scale_full

    # 4) 1x1 project conv (BN folded) + optional residual; lane-dense store.
    out = jnp.dot(w3_ref[...], x2.astype(jnp.bfloat16),
                  preferred_element_type=jnp.float32) + b3_ref[...]
    if add:
        out = out + x
    o_ref[...] = out


# ----------------------------------------------------------------------------
# Host-side glue: BN folding, mask / pooling-matrix construction, pallas_call.
# ----------------------------------------------------------------------------
def _fold_bn(gamma, beta, mean, var):
    scale = gamma / jnp.sqrt(var + EPS)
    bias = beta - mean * scale
    return scale, bias


def bneck_forward(x_nchw, raw, *, kernel_size, stride, se, add,
                  images_per_step=None):
    assert stride == 1, "only stride=1 implemented"
    N, Cin, H, W = x_nchw.shape
    HW = H * W
    K = kernel_size
    p = K // 2

    # Images per grid step: fold batch into the lane axis, but keep >= 2 grid
    # steps when possible (v7x has two TensorCores).  Cap the lane width so
    # the (E, B*HW) activation slab stays comfortably inside VMEM.
    if images_per_step is None:
        B = N // 2 if (N % 2 == 0 and N >= 2) else 1
        max_b = max(1, 16384 // HW)
        while B > max_b and B % 2 == 0:
            B //= 2
    else:
        B = images_per_step
    assert N % B == 0
    steps = N // B
    n = B * HW

    s1, b1 = _fold_bn(*raw["bn1"])
    s2, b2 = _fold_bn(*raw["bn2"])
    s3, b3 = _fold_bn(*raw["bn3"])

    w1f = (raw["c1_w"][:, :, 0, 0] * s1[:, None]).astype(jnp.bfloat16)
    E = w1f.shape[0]
    wdf = raw["cd_w"][:, 0, :, :].reshape(E, K * K) * s2[:, None]
    wdf = jnp.transpose(wdf, (1, 0))[:, :, None]                # (K*K, E, 1)
    w3f = (raw["c3_w"][:, :, 0, 0] * s3[:, None]).astype(jnp.bfloat16)
    Cout = w3f.shape[0]
    wfc1 = raw["fc1_w"].astype(jnp.bfloat16)                    # (r, E)
    wfc2 = raw["fc2_w"].astype(jnp.bfloat16)                    # (E, r)
    r = wfc1.shape[0]
    if add:
        assert Cin == Cout

    # Combined row+column validity mask per depthwise tap, tiled over the B
    # images folded into the lane axis (also guards cross-image roll leakage).
    idx = jnp.arange(HW, dtype=jnp.int32)
    ii, jj = idx // W, idx % W
    tap_masks = []
    for ki in range(K):
        for kj in range(K):
            di, dj = ki - p, kj - p
            valid = ((ii + di >= 0) & (ii + di < H) &
                     (jj + dj >= 0) & (jj + dj < W))
            tap_masks.append(valid.astype(jnp.float32))
    mask_all = jnp.tile(jnp.stack(tap_masks, axis=0), (1, B))   # (K*K, n)

    # Block mean-pool / broadcast matrices for the SE path.
    bcast_f32 = jnp.repeat(jnp.eye(B, dtype=jnp.float32), HW, axis=1)  # (B, n)
    pool_mat = (bcast_f32.T / HW).astype(jnp.bfloat16)                  # (n, B)
    bcast = bcast_f32.astype(jnp.bfloat16)

    # Channels-first slab with batch folded into the lane (spatial) axis.
    x_cf = jnp.transpose(x_nchw.reshape(N, Cin, HW), (1, 0, 2)).reshape(
        Cin, N * HW)

    kern = functools.partial(_bneck_kernel, K=K, W=W, HW=HW, B=B,
                             se=se, add=add)
    out = pl.pallas_call(
        kern,
        out_shape=jax.ShapeDtypeStruct((Cout, N * HW), jnp.float32),
        grid_spec=pltpu.PrefetchScalarGridSpec(
            num_scalar_prefetch=0,
            grid=(steps,),
            in_specs=[
                pl.BlockSpec((Cin, n), lambda s: (0, s)),
                pl.BlockSpec((E, Cin), lambda s: (0, 0)),
                pl.BlockSpec((E, 1), lambda s: (0, 0)),
                pl.BlockSpec((K * K, E, 1), lambda s: (0, 0, 0)),
                pl.BlockSpec((E, 1), lambda s: (0, 0)),
                pl.BlockSpec((K * K, n), lambda s: (0, 0)),
                pl.BlockSpec((r, E), lambda s: (0, 0)),
                pl.BlockSpec((E, r), lambda s: (0, 0)),
                pl.BlockSpec((n, B), lambda s: (0, 0)),
                pl.BlockSpec((B, n), lambda s: (0, 0)),
                pl.BlockSpec((Cout, E), lambda s: (0, 0)),
                pl.BlockSpec((Cout, 1), lambda s: (0, 0)),
            ],
            out_specs=pl.BlockSpec((Cout, n), lambda s: (0, s)),
        ),
        compiler_params=pltpu.CompilerParams(
            dimension_semantics=("parallel",),
        ),
    )(x_cf, w1f, b1[:, None], wdf, b2[:, None], mask_all,
      wfc1, wfc2, pool_mat, bcast, w3f, b3[:, None])

    return jnp.transpose(out.reshape(Cout, N, HW), (1, 0, 2)).reshape(
        N, Cout, H, W)


# ----------------------------------------------------------------------------
# Pure-JAX reference (for validation), NCHW like the PyTorch module.
# ----------------------------------------------------------------------------
def ref_forward(x, p, *, kernel_size, stride, se, add):
    def bn(y, params):
        g, b, m, v = params
        inv = g / jnp.sqrt(v + EPS)
        return (y - m[None, :, None, None]) * inv[None, :, None, None] \
            + b[None, :, None, None]

    pad = kernel_size // 2
    dn = ("NCHW", "OIHW", "NCHW")
    y = lax.conv_general_dilated(x, p["c1_w"], (1, 1), [(0, 0), (0, 0)],
                                 dimension_numbers=dn)
    y = jnp.maximum(bn(y, p["bn1"]), 0.0)
    y = lax.conv_general_dilated(y, p["cd_w"], (stride, stride),
                                 [(pad, pad), (pad, pad)], dimension_numbers=dn,
                                 feature_group_count=p["cd_w"].shape[0])
    y = jnp.maximum(bn(y, p["bn2"]), 0.0)
    if se:
        f = jnp.mean(y, axis=(2, 3))
        f = jnp.maximum(f @ p["fc1_w"].T, 0.0)
        f = jnp.clip((f @ p["fc2_w"].T + 3.0) / 6.0, 0.0, 1.0)
        y = y * f[:, :, None, None]
    z = lax.conv_general_dilated(y, p["c3_w"], (1, 1), [(0, 0), (0, 0)],
                                 dimension_numbers=dn)
    z = bn(z, p["bn3"])
    if add:
        z = z + x
    return z


# ----------------------------------------------------------------------------
def make_params(key, cin, cout, exp, k):
    ks = jax.random.split(key, 8)
    r = exp // 4

    def bn_params(k1, c):
        a, b, c_, d = jax.random.split(k1, 4)
        gamma = 1.0 + 0.1 * jax.random.normal(a, (c,), jnp.float32)
        beta = 0.1 * jax.random.normal(b, (c,), jnp.float32)
        mean = 0.1 * jax.random.normal(c_, (c,), jnp.float32)
        var = 0.5 + 0.5 * jnp.abs(jax.random.normal(d, (c,), jnp.float32))
        return (gamma, beta, mean, var)

    return {
        "c1_w": 0.2 * jax.random.normal(ks[0], (exp, cin, 1, 1), jnp.float32),
        "bn1": bn_params(ks[1], exp),
        "cd_w": 0.2 * jax.random.normal(ks[2], (exp, 1, k, k), jnp.float32),
        "bn2": bn_params(ks[3], exp),
        "fc1_w": 0.2 * jax.random.normal(ks[4], (r, exp), jnp.float32),
        "fc2_w": 0.2 * jax.random.normal(ks[5], (exp, r), jnp.float32),
        "c3_w": 0.2 * jax.random.normal(ks[6], (cout, exp, 1, 1), jnp.float32),
        "bn3": bn_params(ks[7], cout),
    }


if __name__ == "__main__":
    # BNeck(in_channels=16, out_channels=16, kernel_size=3, exp_size=32,
    #       se=True, act=ReLU, stride=1)  -> add (residual) is True
    # Batch of 4 -> 2 images per grid step (2 steps: both v7x TCs get work,
    # 512 dense lanes per matmul).
    N, Cin, H, W = 4, 16, 16, 16
    Cout, E, K, STRIDE, SE = 16, 32, 3, 1, True
    ADD = (Cin == Cout) and (STRIDE == 1)

    key = jax.random.PRNGKey(0)
    kx, kp = jax.random.split(key)
    x = jax.random.normal(kx, (N, Cin, H, W), jnp.float32)
    params = make_params(kp, Cin, Cout, E, K)

    out = bneck_forward(x, params, kernel_size=K, stride=STRIDE, se=SE, add=ADD)
    out = jax.block_until_ready(out)

    ref = jax.block_until_ready(
        ref_forward(x, params, kernel_size=K, stride=STRIDE, se=SE, add=ADD))

    assert out.shape == (N, Cout, H, W), out.shape
    # bf16 matmul operands (f32 accumulation) vs. f32 reference.
    assert jnp.allclose(out, ref, atol=3e-2, rtol=3e-2), float(
        jnp.max(jnp.abs(out - ref)))
    print("KERNEL_OK")
</pallas_src>

<mosaic_0001>
module attributes {stable_mosaic.version = 11 : i64} {
  func.func @_bneck_kernel(%arg0: i32, %arg1: memref<16x512xf32, #tpu.memory_space<vmem>>, %arg2: memref<32x16xbf16, #tpu.memory_space<vmem>>, %arg3: memref<32x1xf32, #tpu.memory_space<vmem>>, %arg4: memref<9x32x1xf32, #tpu.memory_space<vmem>>, %arg5: memref<32x1xf32, #tpu.memory_space<vmem>>, %arg6: memref<9x512xf32, #tpu.memory_space<vmem>>, %arg7: memref<8x32xbf16, #tpu.memory_space<vmem>>, %arg8: memref<32x8xbf16, #tpu.memory_space<vmem>>, %arg9: memref<512x2xbf16, #tpu.memory_space<vmem>>, %arg10: memref<2x512xbf16, #tpu.memory_space<vmem>>, %arg11: memref<16x32xbf16, #tpu.memory_space<vmem>>, %arg12: memref<16x1xf32, #tpu.memory_space<vmem>>, %arg13: memref<16x512xf32, #tpu.memory_space<vmem>>) attributes {dimension_semantics = [#tpu.dimension_semantics<parallel>], iteration_bounds = array<i64: 2>, scalar_prefetch = 0 : i64, scratch_operands = 0 : i64, tpu.core_type = #tpu.core_type<tc>, window_params = [{transform_indices = @transform_0, window_bounds = array<i64: 16, 512>}, {pipeline_mode = #tpu.pipeline_mode<synchronous>, transform_indices = @transform_1, window_bounds = array<i64: 32, 16>}, {pipeline_mode = #tpu.pipeline_mode<synchronous>, transform_indices = @transform_2, window_bounds = array<i64: 32, 1>}, {pipeline_mode = #tpu.pipeline_mode<synchronous>, transform_indices = @transform_3, window_bounds = array<i64: 9, 32, 1>}, {pipeline_mode = #tpu.pipeline_mode<synchronous>, transform_indices = @transform_4, window_bounds = array<i64: 32, 1>}, {pipeline_mode = #tpu.pipeline_mode<synchronous>, transform_indices = @transform_5, window_bounds = array<i64: 9, 512>}, {pipeline_mode = #tpu.pipeline_mode<synchronous>, transform_indices = @transform_6, window_bounds = array<i64: 8, 32>}, {pipeline_mode = #tpu.pipeline_mode<synchronous>, transform_indices = @transform_7, window_bounds = array<i64: 32, 8>}, {pipeline_mode = #tpu.pipeline_mode<synchronous>, transform_indices = @transform_8, window_bounds = array<i64: 512, 2>}, {pipeline_mode = #tpu.pipeline_mode<synchronous>, transform_indices = @transform_9, window_bounds = array<i64: 2, 512>}, {pipeline_mode = #tpu.pipeline_mode<synchronous>, transform_indices = @transform_10, window_bounds = array<i64: 16, 32>}, {pipeline_mode = #tpu.pipeline_mode<synchronous>, transform_indices = @transform_11, window_bounds = array<i64: 16, 1>}, {transform_indices = @transform_12, window_bounds = array<i64: 16, 512>}]} {
    %c0 = arith.constant 0 : index
    %c0_0 = arith.constant 0 : index
    %0 = vector.load %arg1[%c0, %c0_0] : memref<16x512xf32, #tpu.memory_space<vmem>>, vector<16x512xf32>
    %c0_1 = arith.constant 0 : index
    %c0_2 = arith.constant 0 : index
    %1 = vector.load %arg2[%c0_1, %c0_2] : memref<32x16xbf16, #tpu.memory_space<vmem>>, vector<32x16xbf16>
    %2 = arith.truncf %0 : vector<16x512xf32> to vector<16x512xbf16>
    %cst = arith.constant dense<0.000000e+00> : vector<32x512xf32>
    %3 = tpu.matmul %1, %2, %cst {dimension_numbers = #tpu.dot_dimension_numbers<[1], [0], [0], [1], [0, 0, 1, 1], [], []>} : vector<32x16xbf16>, vector<16x512xbf16>, vector<32x512xf32> -> vector<32x512xf32>
    %c0_3 = arith.constant 0 : index
    %c0_4 = arith.constant 0 : index
    %4 = vector.load %arg3[%c0_3, %c0_4] : memref<32x1xf32, #tpu.memory_space<vmem>>, vector<32x1xf32>
    %5 = vector.broadcast %4 : vector<32x1xf32> to vector<32x512xf32>
    %6 = arith.addf %3, %5 : vector<32x512xf32>
    %cst_5 = arith.constant 0.000000e+00 : f32
    %7 = vector.broadcast %cst_5 : f32 to vector<32x512xf32>
    %8 = arith.maximumf %6, %7 : vector<32x512xf32>
    %c0_6 = arith.constant 0 : index
    %c0_7 = arith.constant 0 : index
    %c0_8 = arith.constant 0 : index
    %9 = vector.load %arg4[%c0_6, %c0_7, %c0_8] : memref<9x32x1xf32, #tpu.memory_space<vmem>>, vector<9x32x1xf32>
    %c0_9 = arith.constant 0 : index
    %c0_10 = arith.constant 0 : index
    %10 = vector.load %arg6[%c0_9, %c0_10] : memref<9x512xf32, #tpu.memory_space<vmem>>, vector<9x512xf32>
    %cst_11 = arith.constant 0.000000e+00 : f32
    %11 = vector.broadcast %cst_11 : f32 to vector<32x512xf32>
    %c17_i32 = arith.constant 17 : i32
    %12 = tpu.dynamic_rotate %8 by %c17_i32 dim 1 : vector<32x512xf32>, i32 -> vector<32x512xf32>
    %13 = vector.extract_strided_slice %9 {offsets = [0, 0, 0], sizes = [1, 32, 1], strides = [1, 1, 1]} : vector<9x32x1xf32> to vector<1x32x1xf32>
    %14 = vector.shape_cast %13 : vector<1x32x1xf32> to vector<32x1xf32>
    %15 = vector.broadcast %14 : vector<32x1xf32> to vector<32x512xf32>
    %16 = arith.mulf %12, %15 : vector<32x512xf32>
    %17 = vector.extract_strided_slice %10 {offsets = [0, 0], sizes = [1, 512], strides = [1, 1]} : vector<9x512xf32> to vector<1x512xf32>
    %18 = vector.broadcast %17 : vector<1x512xf32> to vector<32x512xf32>
    %19 = arith.mulf %16, %18 : vector<32x512xf32>
    %20 = arith.addf %11, %19 : vector<32x512xf32>
    %c16_i32 = arith.constant 16 : i32
    %21 = tpu.dynamic_rotate %8 by %c16_i32 dim 1 : vector<32x512xf32>, i32 -> vector<32x512xf32>
    %22 = vector.extract_strided_slice %9 {offsets = [1, 0, 0], sizes = [1, 32, 1], strides = [1, 1, 1]} : vector<9x32x1xf32> to vector<1x32x1xf32>
    %23 = vector.shape_cast %22 : vector<1x32x1xf32> to vector<32x1xf32>
    %24 = vector.broadcast %23 : vector<32x1xf32> to vector<32x512xf32>
    %25 = arith.mulf %21, %24 : vector<32x512xf32>
    %26 = vector.extract_strided_slice %10 {offsets = [1, 0], sizes = [1, 512], strides = [1, 1]} : vector<9x512xf32> to vector<1x512xf32>
    %27 = vector.broadcast %26 : vector<1x512xf32> to vector<32x512xf32>
    %28 = arith.mulf %25, %27 : vector<32x512xf32>
    %29 = arith.addf %20, %28 : vector<32x512xf32>
    %c15_i32 = arith.constant 15 : i32
    %30 = tpu.dynamic_rotate %8 by %c15_i32 dim 1 : vector<32x512xf32>, i32 -> vector<32x512xf32>
    %31 = vector.extract_strided_slice %9 {offsets = [2, 0, 0], sizes = [1, 32, 1], strides = [1, 1, 1]} : vector<9x32x1xf32> to vector<1x32x1xf32>
    %32 = vector.shape_cast %31 : vector<1x32x1xf32> to vector<32x1xf32>
    %33 = vector.broadcast %32 : vector<32x1xf32> to vector<32x512xf32>
    %34 = arith.mulf %30, %33 : vector<32x512xf32>
    %35 = vector.extract_strided_slice %10 {offsets = [2, 0], sizes = [1, 512], strides = [1, 1]} : vector<9x512xf32> to vector<1x512xf32>
    %36 = vector.broadcast %35 : vector<1x512xf32> to vector<32x512xf32>
    %37 = arith.mulf %34, %36 : vector<32x512xf32>
    %38 = arith.addf %29, %37 : vector<32x512xf32>
    %c1_i32 = arith.constant 1 : i32
    %39 = tpu.dynamic_rotate %8 by %c1_i32 dim 1 : vector<32x512xf32>, i32 -> vector<32x512xf32>
    %40 = vector.extract_strided_slice %9 {offsets = [3, 0, 0], sizes = [1, 32, 1], strides = [1, 1, 1]} : vector<9x32x1xf32> to vector<1x32x1xf32>
    %41 = vector.shape_cast %40 : vector<1x32x1xf32> to vector<32x1xf32>
    %42 = vector.broadcast %41 : vector<32x1xf32> to vector<32x512xf32>
    %43 = arith.mulf %39, %42 : vector<32x512xf32>
    %44 = vector.extract_strided_slice %10 {offsets = [3, 0], sizes = [1, 512], strides = [1, 1]} : vector<9x512xf32> to vector<1x512xf32>
    %45 = vector.broadcast %44 : vector<1x512xf32> to vector<32x512xf32>
    %46 = arith.mulf %43, %45 : vector<32x512xf32>
    %47 = arith.addf %38, %46 : vector<32x512xf32>
    %48 = vector.extract_strided_slice %9 {offsets = [4, 0, 0], sizes = [1, 32, 1], strides = [1, 1, 1]} : vector<9x32x1xf32> to vector<1x32x1xf32>
    %49 = vector.shape_cast %48 : vector<1x32x1xf32> to vector<32x1xf32>
    %50 = vector.broadcast %49 : vector<32x1xf32> to vector<32x512xf32>
    %51 = arith.mulf %8, %50 : vector<32x512xf32>
    %52 = arith.addf %47, %51 : vector<32x512xf32>
    %c511_i32 = arith.constant 511 : i32
    %53 = tpu.dynamic_rotate %8 by %c511_i32 dim 1 : vector<32x512xf32>, i32 -> vector<32x512xf32>
    %54 = vector.extract_strided_slice %9 {offsets = [5, 0, 0], sizes = [1, 32, 1], strides = [1, 1, 1]} : vector<9x32x1xf32> to vector<1x32x1xf32>
    %55 = vector.shape_cast %54 : vector<1x32x1xf32> to vector<32x1xf32>
    %56 = vector.broadcast %55 : vector<32x1xf32> to vector<32x512xf32>
    %57 = arith.mulf %53, %56 : vector<32x512xf32>
    %58 = vector.extract_strided_slice %10 {offsets = [5, 0], sizes = [1, 512], strides = [1, 1]} : vector<9x512xf32> to vector<1x512xf32>
    %59 = vector.broadcast %58 : vector<1x512xf32> to vector<32x512xf32>
    %60 = arith.mulf %57, %59 : vector<32x512xf32>
    %61 = arith.addf %52, %60 : vector<32x512xf32>
    %c497_i32 = arith.constant 497 : i32
    %62 = tpu.dynamic_rotate %8 by %c497_i32 dim 1 : vector<32x512xf32>, i32 -> vector<32x512xf32>
    %63 = vector.extract_strided_slice %9 {offsets = [6, 0, 0], sizes = [1, 32, 1], strides = [1, 1, 1]} : vector<9x32x1xf32> to vector<1x32x1xf32>
    %64 = vector.shape_cast %63 : vector<1x32x1xf32> to vector<32x1xf32>
    %65 = vector.broadcast %64 : vector<32x1xf32> to vector<32x512xf32>
    %66 = arith.mulf %62, %65 : vector<32x512xf32>
    %67 = vector.extract_strided_slice %10 {offsets = [6, 0], sizes = [1, 512], strides = [1, 1]} : vector<9x512xf32> to vector<1x512xf32>
    %68 = vector.broadcast %67 : vector<1x512xf32> to vector<32x512xf32>
    %69 = arith.mulf %66, %68 : vector<32x512xf32>
    %70 = arith.addf %61, %69 : vector<32x512xf32>
    %c496_i32 = arith.constant 496 : i32
    %71 = tpu.dynamic_rotate %8 by %c496_i32 dim 1 : vector<32x512xf32>, i32 -> vector<32x512xf32>
    %72 = vector.extract_strided_slice %9 {offsets = [7, 0, 0], sizes = [1, 32, 1], strides = [1, 1, 1]} : vector<9x32x1xf32> to vector<1x32x1xf32>
    %73 = vector.shape_cast %72 : vector<1x32x1xf32> to vector<32x1xf32>
    %74 = vector.broadcast %73 : vector<32x1xf32> to vector<32x512xf32>
    %75 = arith.mulf %71, %74 : vector<32x512xf32>
    %76 = vector.extract_strided_slice %10 {offsets = [7, 0], sizes = [1, 512], strides = [1, 1]} : vector<9x512xf32> to vector<1x512xf32>
    %77 = vector.broadcast %76 : vector<1x512xf32> to vector<32x512xf32>
    %78 = arith.mulf %75, %77 : vector<32x512xf32>
    %79 = arith.addf %70, %78 : vector<32x512xf32>
    %c495_i32 = arith.constant 495 : i32
    %80 = tpu.dynamic_rotate %8 by %c495_i32 dim 1 : vector<32x512xf32>, i32 -> vector<32x512xf32>
    %81 = vector.extract_strided_slice %9 {offsets = [8, 0, 0], sizes = [1, 32, 1], strides = [1, 1, 1]} : vector<9x32x1xf32> to vector<1x32x1xf32>
    %82 = vector.shape_cast %81 : vector<1x32x1xf32> to vector<32x1xf32>
    %83 = vector.broadcast %82 : vector<32x1xf32> to vector<32x512xf32>
    %84 = arith.mulf %80, %83 : vector<32x512xf32>
    %85 = vector.extract_strided_slice %10 {offsets = [8, 0], sizes = [1, 512], strides = [1, 1]} : vector<9x512xf32> to vector<1x512xf32>
    %86 = vector.broadcast %85 : vector<1x512xf32> to vector<32x512xf32>
    %87 = arith.mulf %84, %86 : vector<32x512xf32>
    %88 = arith.addf %79, %87 : vector<32x512xf32>
    %c0_12 = arith.constant 0 : index
    %c0_13 = arith.constant 0 : index
    %89 = vector.load %arg5[%c0_12, %c0_13] : memref<32x1xf32, #tpu.memory_space<vmem>>, vector<32x1xf32>
    %90 = vector.broadcast %89 : vector<32x1xf32> to vector<32x512xf32>
    %91 = arith.addf %88, %90 : vector<32x512xf32>
    %cst_14 = arith.constant 0.000000e+00 : f32
    %92 = vector.broadcast %cst_14 : f32 to vector<32x512xf32>
    %93 = arith.maximumf %91, %92 : vector<32x512xf32>
    %94 = arith.truncf %93 : vector<32x512xf32> to vector<32x512xbf16>
    %c0_15 = arith.constant 0 : index
    %c0_16 = arith.constant 0 : index
    %95 = vector.load %arg9[%c0_15, %c0_16] : memref<512x2xbf16, #tpu.memory_space<vmem>>, vector<512x2xbf16>
    %cst_17 = arith.constant dense<0.000000e+00> : vector<32x2xf32>
    %96 = tpu.matmul %94, %95, %cst_17 {dimension_numbers = #tpu.dot_dimension_numbers<[1], [0], [0], [1], [0, 0, 1, 1], [], []>} : vector<32x512xbf16>, vector<512x2xbf16>, vector<32x2xf32> -> vector<32x2xf32>
    %c0_18 = arith.constant 0 : index
    %c0_19 = arith.constant 0 : index
    %97 = vector.load %arg7[%c0_18, %c0_19] : memref<8x32xbf16, #tpu.memory_space<vmem>>, vector<8x32xbf16>
    %98 = arith.truncf %96 : vector<32x2xf32> to vector<32x2xbf16>
    %cst_20 = arith.constant dense<0.000000e+00> : vector<8x2xf32>
    %99 = tpu.matmul %97, %98, %cst_20 {dimension_numbers = #tpu.dot_dimension_numbers<[1], [0], [0], [1], [0, 0, 1, 1], [], []>} : vector<8x32xbf16>, vector<32x2xbf16>, vector<8x2xf32> -> vector<8x2xf32>
    %cst_21 = arith.constant 0.000000e+00 : f32
    %100 = vector.broadcast %cst_21 : f32 to vector<8x2xf32>
    %101 = arith.maximumf %99, %100 : vector<8x2xf32>
    %c0_22 = arith.constant 0 : index
    %c0_23 = arith.constant 0 : index
    %102 = vector.load %arg8[%c0_22, %c0_23] : memref<32x8xbf16, #tpu.memory_space<vmem>>, vector<32x8xbf16>
    %103 = arith.truncf %101 : vector<8x2xf32> to vector<8x2xbf16>
    %cst_24 = arith.constant dense<0.000000e+00> : vector<32x2xf32>
    %104 = tpu.matmul %102, %103, %cst_24 {dimension_numbers = #tpu.dot_dimension_numbers<[1], [0], [0], [1], [0, 0, 1, 1], [], []>} : vector<32x8xbf16>, vector<8x2xbf16>, vector<32x2xf32> -> vector<32x2xf32>
    %cst_25 = arith.constant 3.000000e+00 : f32
    %105 = vector.broadcast %cst_25 : f32 to vector<32x2xf32>
    %106 = arith.addf %104, %105 : vector<32x2xf32>
    %cst_26 = arith.constant 6.000000e+00 : f32
    %107 = vector.broadcast %cst_26 : f32 to vector<32x2xf32>
    %108 = arith.divf %106, %107 : vector<32x2xf32>
    %cst_27 = arith.constant 0.000000e+00 : f32
    %cst_28 = arith.constant 1.000000e+00 : f32
    %109 = vector.broadcast %cst_27 : f32 to vector<32x2xf32>
    %110 = arith.maximumf %109, %108 : vector<32x2xf32>
    %111 = vector.broadcast %cst_28 : f32 to vector<32x2xf32>
    %112 = arith.minimumf %111, %110 : vector<32x2xf32>
    %113 = arith.truncf %112 : vector<32x2xf32> to vector<32x2xbf16>
    %c0_29 = arith.constant 0 : index
    %c0_30 = arith.constant 0 : index
    %114 = vector.load %arg10[%c0_29, %c0_30] : memref<2x512xbf16, #tpu.memory_space<vmem>>, vector<2x512xbf16>
    %cst_31 = arith.constant dense<0.000000e+00> : vector<32x512xf32>
    %115 = tpu.matmul %113, %114, %cst_31 {dimension_numbers = #tpu.dot_dimension_numbers<[1], [0], [0], [1], [0, 0, 1, 1], [], []>} : vector<32x2xbf16>, vector<2x512xbf16>, vector<32x512xf32> -> vector<32x512xf32>
    %116 = arith.mulf %93, %115 : vector<32x512xf32>
    %c0_32 = arith.constant 0 : index
    %c0_33 = arith.constant 0 : index
    %117 = vector.load %arg11[%c0_32, %c0_33] : memref<16x32xbf16, #tpu.memory_space<vmem>>, vector<16x32xbf16>
    %118 = arith.truncf %116 : vector<32x512xf32> to vector<32x512xbf16>
    %cst_34 = arith.constant dense<0.000000e+00> : vector<16x512xf32>
    %119 = tpu.matmul %117, %118, %cst_34 {dimension_numbers = #tpu.dot_dimension_numbers<[1], [0], [0], [1], [0, 0, 1, 1], [], []>} : vector<16x32xbf16>, vector<32x512xbf16>, vector<16x512xf32> -> vector<16x512xf32>
    %c0_35 = arith.constant 0 : index
    %c0_36 = arith.constant 0 : index
    %120 = vector.load %arg12[%c0_35, %c0_36] : memref<16x1xf32, #tpu.memory_space<vmem>>, vector<16x1xf32>
    %121 = vector.broadcast %120 : vector<16x1xf32> to vector<16x512xf32>
    %122 = arith.addf %119, %121 : vector<16x512xf32>
    %123 = arith.addf %122, %0 : vector<16x512xf32>
    %c0_37 = arith.constant 0 : index
    %c0_38 = arith.constant 0 : index
    %124 = vector.load %arg13[%c0_37, %c0_38] : memref<16x512xf32, #tpu.memory_space<vmem>>, vector<16x512xf32>
    tpu.vector_store %arg13[%c0_37, %c0_38], %123 {strides = array<i32>} : memref<16x512xf32, #tpu.memory_space<vmem>>, vector<16x512xf32>,
    return
  }
  func.func @transform_0(%arg0: i32) -> (i32, i32) {
    %c0_i32 = arith.constant 0 : i32
    %c0_i32_0 = arith.constant 0 : i32
    return %c0_i32, %arg0 : i32, i32
  }
  func.func @transform_1(%arg0: i32) -> (i32, i32) {
    %c0_i32 = arith.constant 0 : i32
    %c0_i32_0 = arith.constant 0 : i32
    %c0_i32_1 = arith.constant 0 : i32
    return %c0_i32, %c0_i32_0 : i32, i32
  }
  func.func @transform_2(%arg0: i32) -> (i32, i32) {
    %c0_i32 = arith.constant 0 : i32
    %c0_i32_0 = arith.constant 0 : i32
    %c0_i32_1 = arith.constant 0 : i32
    return %c0_i32, %c0_i32_0 : i32, i32
  }
  func.func @transform_3(%arg0: i32) -> (i32, i32, i32) {
    %c0_i32 = arith.constant 0 : i32
    %c0_i32_0 = arith.constant 0 : i32
    %c0_i32_1 = arith.constant 0 : i32
    %c0_i32_2 = arith.constant 0 : i32
    return %c0_i32, %c0_i32_0, %c0_i32_1 : i32, i32, i32
  }
  func.func @transform_4(%arg0: i32) -> (i32, i32) {
    %c0_i32 = arith.constant 0 : i32
    %c0_i32_0 = arith.constant 0 : i32
    %c0_i32_1 = arith.constant 0 : i32
    return %c0_i32, %c0_i32_0 : i32, i32
  }
  func.func @transform_5(%arg0: i32) -> (i32, i32) {
    %c0_i32 = arith.constant 0 : i32
    %c0_i32_0 = arith.constant 0 : i32
    %c0_i32_1 = arith.constant 0 : i32
    return %c0_i32, %c0_i32_0 : i32, i32
  }
  func.func @transform_6(%arg0: i32) -> (i32, i32) {
    %c0_i32 = arith.constant 0 : i32
    %c0_i32_0 = arith.constant 0 : i32
    %c0_i32_1 = arith.constant 0 : i32
    return %c0_i32, %c0_i32_0 : i32, i32
  }
  func.func @transform_7(%arg0: i32) -> (i32, i32) {
    %c0_i32 = arith.constant 0 : i32
    %c0_i32_0 = arith.constant 0 : i32
    %c0_i32_1 = arith.constant 0 : i32
    return %c0_i32, %c0_i32_0 : i32, i32
  }
  func.func @transform_8(%arg0: i32) -> (i32, i32) {
    %c0_i32 = arith.constant 0 : i32
    %c0_i32_0 = arith.constant 0 : i32
    %c0_i32_1 = arith.constant 0 : i32
    return %c0_i32, %c0_i32_0 : i32, i32
  }
  func.func @transform_9(%arg0: i32) -> (i32, i32) {
    %c0_i32 = arith.constant 0 : i32
    %c0_i32_0 = arith.constant 0 : i32
    %c0_i32_1 = arith.constant 0 : i32
    return %c0_i32, %c0_i32_0 : i32, i32
  }
  func.func @transform_10(%arg0: i32) -> (i32, i32) {
    %c0_i32 = arith.constant 0 : i32
    %c0_i32_0 = arith.constant 0 : i32
    %c0_i32_1 = arith.constant 0 : i32
    return %c0_i32, %c0_i32_0 : i32, i32
  }
  func.func @transform_11(%arg0: i32) -> (i32, i32) {
    %c0_i32 = arith.constant 0 : i32
    %c0_i32_0 = arith.constant 0 : i32
    %c0_i32_1 = arith.constant 0 : i32
    return %c0_i32, %c0_i32_0 : i32, i32
  }
  func.func @transform_12(%arg0: i32) -> (i32, i32) {
    %c0_i32 = arith.constant 0 : i32
    %c0_i32_0 = arith.constant 0 : i32
    return %c0_i32, %arg0 : i32, i32
  }
}

</mosaic_0001>

<llo_original>
// kernel: tpu_custom_call.1
$region0: #{tpu_custom_call.1}
  #allocation0 [shape = 'u32[]', space=smem, size = 0x4, offset = 0x4, fixed_abs, tag = 'smem constant byte address 0x4 - core index']
  #allocation1 [shape = 'u32[144,128]{1,0:T(1,128)}', space=vmem, size = 0x12000, scoped, tag = 'internal scratch']
  %s0 = inlined_call_operand.vmem [shape: f32[16,1024], index: 0, kind: input, shape index: {}]
  %s1 = inlined_call_operand.vmem [shape: bf16[32,16], index: 1, kind: input, shape index: {}]
  %s2 = inlined_call_operand.vmem [shape: f32[32,1], index: 2, kind: input, shape index: {}]
  %s3 = inlined_call_operand.vmem [shape: f32[9,32,1], index: 3, kind: input, shape index: {}]
  %s4 = inlined_call_operand.vmem [shape: f32[32,1], index: 4, kind: input, shape index: {}]
  %s5 = inlined_call_operand.vmem [shape: f32[9,512], index: 5, kind: input, shape index: {}]
  %s6 = inlined_call_operand.vmem [shape: bf16[8,32], index: 6, kind: input, shape index: {}]
  %s7 = inlined_call_operand.vmem [shape: bf16[32,8], index: 7, kind: input, shape index: {}]
  %s8 = inlined_call_operand.vmem [shape: bf16[512,2], index: 8, kind: input, shape index: {}]
  %s9 = inlined_call_operand.vmem [shape: bf16[2,512], index: 9, kind: input, shape index: {}]
  %s10 = inlined_call_operand.vmem [shape: bf16[16,32], index: 10, kind: input, shape index: {}]
  %s11 = inlined_call_operand.vmem [shape: f32[16,1], index: 11, kind: input, shape index: {}]
  %s12 = inlined_call_operand.hbm [shape: f32[16,1024], index: 12, kind: output, shape index: {}]
  %s13 = sld [smem:[#allocation0]]
  $region104: #{tpu_custom_call.1} parent=0
    _
  %s15 = ssub.s32 1, %s13
  %s16 = scalar_select 0, %s15, %s13
  $region1: #{tpu_custom_call.1} parent=0
    #allocation2 [shape = 'u8[65536]{0}', space=vmem, size = 0x10000, scoped, tag = 'input window, operand 0']
    #allocation3 [shape = 'u8[65536]{0}', space=vmem, size = 0x10000, scoped, tag = 'output window, operand 0']
    #allocation4 [shape = 's32[2]{0}', space=sflag, size = 0x8, scoped, tag = 'scoped memory for tpu_custom_call.1']
    %17 = vsyncpa [#allocation4], 0
    %s18 = scalar_lea.sflag [#allocation4], 1
    %19 = vsyncpa %s18, 0
    loop: start=0, step=1, limit=4
    $region2: #{tpu_custom_call.1} parent=1 // loop_pre_header
      _
    $region3: #{tpu_custom_call.1} parent=1 // loop_header
      %s21 = sphi 0, %s25
      %p22 = scmp.ge.s32.totalorder %s21, 4
      %s31 = sphi 0, %s33
      %s34 = sphi 0, %s31
      %s35 = sphi 0, %s34
      %s51 = sphi 0, %s35
      %s55 = sphi 0, %s55
      %s57 = sphi 0, %s55
      %s58 = sphi 0, %s57
      %s72 = sphi 0, %s58
      %s76 = sphi 0, %s76
      %s78 = sphi 0, %s76
      %s79 = sphi 0, %s78
      %s93 = sphi 0, %s79
      %s97 = sphi 0, %s97
      %s99 = sphi 0, %s97
      %s100 = sphi 0, %s99
      %s114 = sphi 0, %s100
      %s118 = sphi 0, %s118
      %s120 = sphi 0, %s118
      %s121 = sphi 0, %s120
      %s135 = sphi 0, %s121
      %s139 = sphi 0, %s139
      %s141 = sphi 0, %s139
      %s142 = sphi 0, %s141
      %s156 = sphi 0, %s142
      %s160 = sphi 0, %s160
      %s162 = sphi 0, %s160
      %s163 = sphi 0, %s162
      %s177 = sphi 0, %s163
      %s181 = sphi 0, %s181
      %s183 = sphi 0, %s181
      %s184 = sphi 0, %s183
      %s198 = sphi 0, %s184
      %s202 = sphi 0, %s202
      %s204 = sphi 0, %s202
      %s205 = sphi 0, %s204
      %s219 = sphi 0, %s205
      %s223 = sphi 0, %s223
      %s225 = sphi 0, %s223
      %s226 = sphi 0, %s225
      %s240 = sphi 0, %s226
      %s244 = sphi 0, %s244
      %s246 = sphi 0, %s244
      %s247 = sphi 0, %s246
      %s261 = sphi 0, %s247
      %s265 = sphi 0, %s265
      %s267 = sphi 0, %s265
      %s268 = sphi 0, %s267
      %s282 = sphi 0, %s268
      %s288 = sphi 0, %s290
      %s291 = sphi 0, %s288
      %s292 = sphi 0, %s291
      %s308 = sphi 0, %s292
    $region4: #{tpu_custom_call.1} parent=1 // loop_header_branch
      %24 = sbr.rel (%p22) target = $region8
    $region5: #{tpu_custom_call.1} parent=1 // loop_body
      %s26 = ssub.s32 %s21, 1
      %s27 = ssub.s32 %s21, 2
      %s28 = sadd.s32 %s21, 1
      %s29 = ssub.s32 %s21, %s28
      %p30 = scmp.eq.s32.totalorder %s29, 0
      %s32 = sadd.s32 %s31, 1
      %s33 = scalar_select %p30, %s31, %s32
      %p36 = pneg %p30
      %p37 = scmp.eq.s32.totalorder %s21, 1
      %p38 = por %p36, %p37
      %p39 = scmp.ne.s32.totalorder %s31, %s34
      %p40 = scmp.eq.s32.totalorder %s21, 0
      %p41 = por %p39, %p40
      %p42 = scmp.ne.s32.totalorder %s31, %s34
      %p43 = scmp.eq.s32.totalorder %s26, 1
      %p44 = por %p42, %p43
      %p45 = scmp.ne.s32.totalorder %s34, %s35
      %p46 = scmp.eq.s32.totalorder %s26, 0
      %p47 = por %p45, %p46
      %p48 = scmp.ne.s32.totalorder %s34, %s35
      %p49 = scmp.eq.s32.totalorder %s27, 1
      %p50 = por %p48, %p49
      %p52 = scmp.ne.s32.totalorder %s35, %s51
      %p53 = scmp.eq.s32.totalorder %s27, 0
      %p54 = por %p52, %p53
      %s56 = sadd.s32 %s55, 1
      %p59 = scmp.eq.s32.totalorder %s21, 1
      %p60 = scmp.ne.s32.totalorder %s55, %s57
      %p61 = scmp.eq.s32.totalorder %s21, 0
      %p62 = por %p60, %p61
      %p63 = scmp.ne.s32.totalorder %s55, %s57
      %p64 = scmp.eq.s32.totalorder %s26, 1
      %p65 = por %p63, %p64
      %p66 = scmp.ne.s32.totalorder %s57, %s58
      %p67 = scmp.eq.s32.totalorder %s26, 0
      %p68 = por %p66, %p67
      %p69 = scmp.ne.s32.totalorder %s57, %s58
      %p70 = scmp.eq.s32.totalorder %s27, 1
      %p71 = por %p69, %p70
      %p73 = scmp.ne.s32.totalorder %s58, %s72
      %p74 = scmp.eq.s32.totalorder %s27, 0
      %p75 = por %p73, %p74
      %s77 = sadd.s32 %s76, 1
      %p80 = scmp.eq.s32.totalorder %s21, 1
      %p81 = scmp.ne.s32.totalorder %s76, %s78
      %p82 = scmp.eq.s32.totalorder %s21, 0
      %p83 = por %p81, %p82
      %p84 = scmp.ne.s32.totalorder %s76, %s78
      %p85 = scmp.eq.s32.totalorder %s26, 1
      %p86 = por %p84, %p85
      %p87 = scmp.ne.s32.totalorder %s78, %s79
      %p88 = scmp.eq.s32.totalorder %s26, 0
      %p89 = por %p87, %p88
      %p90 = scmp.ne.s32.totalorder %s78, %s79
      %p91 = scmp.eq.s32.totalorder %s27, 1
      %p92 = por %p90, %p91
      %p94 = scmp.ne.s32.totalorder %s79, %s93
      %p95 = scmp.eq.s32.totalorder %s27, 0
      %p96 = por %p94, %p95
      %s98 = sadd.s32 %s97, 1
      %p101 = scmp.eq.s32.totalorder %s21, 1
      %p102 = scmp.ne.s32.totalorder %s97, %s99
      %p103 = scmp.eq.s32.totalorder %s21, 0
      %p104 = por %p102, %p103
      %p105 = scmp.ne.s32.totalorder %s97, %s99
      %p106 = scmp.eq.s32.totalorder %s26, 1
      %p107 = por %p105, %p106
      %p108 = scmp.ne.s32.totalorder %s99, %s100
      %p109 = scmp.eq.s32.totalorder %s26, 0
      %p110 = por %p108, %p109
      %p111 = scmp.ne.s32.totalorder %s99, %s100
      %p112 = scmp.eq.s32.totalorder %s27, 1
      %p113 = por %p111, %p112
      %p115 = scmp.ne.s32.totalorder %s100, %s114
      %p116 = scmp.eq.s32.totalorder %s27, 0
      %p117 = por %p115, %p116
      %s119 = sadd.s32 %s118, 1
      %p122 = scmp.eq.s32.totalorder %s21, 1
      %p123 = scmp.ne.s32.totalorder %s118, %s120
      %p124 = scmp.eq.s32.totalorder %s21, 0
      %p125 = por %p123, %p124
      %p126 = scmp.ne.s32.totalorder %s118, %s120
      %p127 = scmp.eq.s32.totalorder %s26, 1
      %p128 = por %p126, %p127
      %p129 = scmp.ne.s32.totalorder %s120, %s121
      %p130 = scmp.eq.s32.totalorder %s26, 0
      %p131 = por %p129, %p130
      %p132 = scmp.ne.s32.totalorder %s120, %s121
      %p133 = scmp.eq.s32.totalorder %s27, 1
      %p134 = por %p132, %p133
      %p136 = scmp.ne.s32.totalorder %s121, %s135
      %p137 = scmp.eq.s32.totalorder %s27, 0
      %p138 = por %p136, %p137
      %s140 = sadd.s32 %s139, 1
      %p143 = scmp.eq.s32.totalorder %s21, 1
      %p144 = scmp.ne.s32.totalorder %s139, %s141
      %p145 = scmp.eq.s32.totalorder %s21, 0
      %p146 = por %p144, %p145
      %p147 = scmp.ne.s32.totalorder %s139, %s141
      %p148 = scmp.eq.s32.totalorder %s26, 1
      %p149 = por %p147, %p148
      %p150 = scmp.ne.s32.totalorder %s141, %s142
      %p151 = scmp.eq.s32.totalorder %s26, 0
      %p152 = por %p150, %p151
      %p153 = scmp.ne.s32.totalorder %s141, %s142
      %p154 = scmp.eq.s32.totalorder %s27, 1
      %p155 = por %p153, %p154
      %p157 = scmp.ne.s32.totalorder %s142, %s156
      %p158 = scmp.eq.s32.totalorder %s27, 0
      %p159 = por %p157, %p158
      %s161 = sadd.s32 %s160, 1
      %p164 = scmp.eq.s32.totalorder %s21, 1
      %p165 = scmp.ne.s32.totalorder %s160, %s162
      %p166 = scmp.eq.s32.totalorder %s21, 0
      %p167 = por %p165, %p166
      %p168 = scmp.ne.s32.totalorder %s160, %s162
      %p169 = scmp.eq.s32.totalorder %s26, 1
      %p170 = por %p168, %p169
      %p171 = scmp.ne.s32.totalorder %s162, %s163
      %p172 = scmp.eq.s32.totalorder %s26, 0
      %p173 = por %p171, %p172
      %p174 = scmp.ne.s32.totalorder %s162, %s163
      %p175 = scmp.eq.s32.totalorder %s27, 1
      %p176 = por %p174, %p175
      %p178 = scmp.ne.s32.totalorder %s163, %s177
      %p179 = scmp.eq.s32.totalorder %s27, 0
      %p180 = por %p178, %p179
      %s182 = sadd.s32 %s181, 1
      %p185 = scmp.eq.s32.totalorder %s21, 1
      %p186 = scmp.ne.s32.totalorder %s181, %s183
      %p187 = scmp.eq.s32.totalorder %s21, 0
      %p188 = por %p186, %p187
      %p189 = scmp.ne.s32.totalorder %s181, %s183
      %p190 = scmp.eq.s32.totalorder %s26, 1
      %p191 = por %p189, %p190
      %p192 = scmp.ne.s32.totalorder %s183, %s184
      %p193 = scmp.eq.s32.totalorder %s26, 0
      %p194 = por %p192, %p193
      %p195 = scmp.ne.s32.totalorder %s183, %s184
      %p196 = scmp.eq.s32.totalorder %s27, 1
      %p197 = por %p195, %p196
      %p199 = scmp.ne.s32.totalorder %s184, %s198
      %p200 = scmp.eq.s32.totalorder %s27, 0
      %p201 = por %p199, %p200
      %s203 = sadd.s32 %s202, 1
      %p206 = scmp.eq.s32.totalorder %s21, 1
      %p207 = scmp.ne.s32.totalorder %s202, %s204
      %p208 = scmp.eq.s32.totalorder %s21, 0
      %p209 = por %p207, %p208
      %p210 = scmp.ne.s32.totalorder %s202, %s204
      %p211 = scmp.eq.s32.totalorder %s26, 1
      %p212 = por %p210, %p211
      %p213 = scmp.ne.s32.totalorder %s204, %s205
      %p214 = scmp.eq.s32.totalorder %s26, 0
      %p215 = por %p213, %p214
      %p216 = scmp.ne.s32.totalorder %s204, %s205
      %p217 = scmp.eq.s32.totalorder %s27, 1
      %p218 = por %p216, %p217
      %p220 = scmp.ne.s32.totalorder %s205, %s219
      %p221 = scmp.eq.s32.totalorder %s27, 0
      %p222 = por %p220, %p221
      %s224 = sadd.s32 %s223, 1
      %p227 = scmp.eq.s32.totalorder %s21, 1
      %p228 = scmp.ne.s32.totalorder %s223, %s225
      %p229 = scmp.eq.s32.totalorder %s21, 0
      %p230 = por %p228, %p229
      %p231 = scmp.ne.s32.totalorder %s223, %s225
      %p232 = scmp.eq.s32.totalorder %s26, 1
      %p233 = por %p231, %p232
      %p234 = scmp.ne.s32.totalorder %s225, %s226
      %p235 = scmp.eq.s32.totalorder %s26, 0
      %p236 = por %p234, %p235
      %p237 = scmp.ne.s32.totalorder %s225, %s226
      %p238 = scmp.eq.s32.totalorder %s27, 1
      %p239 = por %p237, %p238
      %p241 = scmp.ne.s32.totalorder %s226, %s240
      %p242 = scmp.eq.s32.totalorder %s27, 0
      %p243 = por %p241, %p242
      %s245 = sadd.s32 %s244, 1
      %p248 = scmp.eq.s32.totalorder %s21, 1
      %p249 = scmp.ne.s32.totalorder %s244, %s246
      %p250 = scmp.eq.s32.totalorder %s21, 0
      %p251 = por %p249, %p250
      %p252 = scmp.ne.s32.totalorder %s244, %s246
      %p253 = scmp.eq.s32.totalorder %s26, 1
      %p254 = por %p252, %p253
      %p255 = scmp.ne.s32.totalorder %s246, %s247
      %p256 = scmp.eq.s32.totalorder %s26, 0
      %p257 = por %p255, %p256
      %p258 = scmp.ne.s32.totalorder %s246, %s247
      %p259 = scmp.eq.s32.totalorder %s27, 1
      %p260 = por %p258, %p259
      %p262 = scmp.ne.s32.totalorder %s247, %s261
      %p263 = scmp.eq.s32.totalorder %s27, 0
      %p264 = por %p262, %p263
      %s266 = sadd.s32 %s265, 1
      %p269 = scmp.eq.s32.totalorder %s21, 1
      %p270 = scmp.ne.s32.totalorder %s265, %s267
      %p271 = scmp.eq.s32.totalorder %s21, 0
      %p272 = por %p270, %p271
      %p273 = scmp.ne.s32.totalorder %s265, %s267
      %p274 = scmp.eq.s32.totalorder %s26, 1
      %p275 = por %p273, %p274
      %p276 = scmp.ne.s32.totalorder %s267, %s268
      %p277 = scmp.eq.s32.totalorder %s26, 0
      %p278 = por %p276, %p277
      %p279 = scmp.ne.s32.totalorder %s267, %s268
      %p280 = scmp.eq.s32.totalorder %s27, 1
      %p281 = por %p279, %p280
      %p283 = scmp.ne.s32.totalorder %s268, %s282
      %p284 = scmp.eq.s32.totalorder %s27, 0
      %p285 = por %p283, %p284
      %s286 = ssub.s32 %s21, %s28
      %p287 = scmp.eq.s32.totalorder %s286, 0
      %s289 = sadd.s32 %s288, 1
      %s290 = scalar_select %p287, %s288, %s289
      %p293 = pneg %p287
      %p294 = scmp.eq.s32.totalorder %s21, 1
      %p295 = por %p293, %p294
      %p296 = scmp.ne.s32.totalorder %s288, %s291
      %p297 = scmp.eq.s32.totalorder %s21, 0
      %p298 = por %p296, %p297
      %p299 = scmp.ne.s32.totalorder %s288, %s291
      %p300 = scmp.eq.s32.totalorder %s26, 1
      %p301 = por %p299, %p300
      %p302 = scmp.ne.s32.totalorder %s291, %s292
      %p303 = scmp.eq.s32.totalorder %s26, 0
      %p304 = por %p302, %p303
      %p305 = scmp.ne.s32.totalorder %s291, %s292
      %p306 = scmp.eq.s32.totalorder %s27, 1
      %p307 = por %p305, %p306
      %p309 = scmp.ne.s32.totalorder %s292, %s308
      %p310 = scmp.eq.s32.totalorder %s27, 0
      %p311 = por %p309, %p310
      %p312 = scmp.le.s32.totalorder 1, %s21
      %p313 = scmp.lt.s32.totalorder %s21, 3
      %p314 = pnand %p312, %p313
      %p315 = pneg %p314
      // Predicated region
      $region9: #{tpu_custom_call.1} parent=5 // pred_check
        _
      $region10: #{tpu_custom_call.1} parent=5 // pred_check_branch
        %317 = sbr.rel (%p314) target = $region12
      $region11: #{tpu_custom_call.1} parent=5 // pred_region
        %s318 = ssub.s32 %s21, 1
        // Predicated region
        $region13: #{tpu_custom_call.1} parent=11 // pred_check
          %p319 = pneg %p68
        $region14: #{tpu_custom_call.1} parent=11 // pred_check_branch
          %321 = sbr.rel (%p319) target = $region16
        $region15: #{tpu_custom_call.1} parent=11 // pred_region
          _
        $region16: #{tpu_custom_call.1} parent=11 // pred_fallthru
          _
        // Predicated region
        $region17: #{tpu_custom_call.1} parent=11 // pred_check
          %p322 = pneg %p89
        $region18: #{tpu_custom_call.1} parent=11 // pred_check_branch
          %324 = sbr.rel (%p322) target = $region20
        $region19: #{tpu_custom_call.1} parent=11 // pred_region
          _
        $region20: #{tpu_custom_call.1} parent=11 // pred_fallthru
          _
        // Predicated region
        $region21: #{tpu_custom_call.1} parent=11 // pred_check
          %p325 = pneg %p110
        $region22: #{tpu_custom_call.1} parent=11 // pred_check_branch
          %327 = sbr.rel (%p325) target = $region24
        $region23: #{tpu_custom_call.1} parent=11 // pred_region
          _
        $region24: #{tpu_custom_call.1} parent=11 // pred_fallthru
          _
        // Predicated region
        $region25: #{tpu_custom_call.1} parent=11 // pred_check
          %p328 = pneg %p131
        $region26: #{tpu_custom_call.1} parent=11 // pred_check_branch
          %330 = sbr.rel (%p328) target = $region28
        $region27: #{tpu_custom_call.1} parent=11 // pred_region
          _
        $region28: #{tpu_custom_call.1} parent=11 // pred_fallthru
          _
        // Predicated region
        $region29: #{tpu_custom_call.1} parent=11 // pred_check
          %p331 = pneg %p152
        $region30: #{tpu_custom_call.1} parent=11 // pred_check_branch
          %333 = sbr.rel (%p331) target = $region32
        $region31: #{tpu_custom_call.1} parent=11 // pred_region
          _
        $region32: #{tpu_custom_call.1} parent=11 // pred_fallthru
          _
        // Predicated region
        $region33: #{tpu_custom_call.1} parent=11 // pred_check
          %p334 = pneg %p173
        $region34: #{tpu_custom_call.1} parent=11 // pred_check_branch
          %336 = sbr.rel (%p334) target = $region36
        $region35: #{tpu_custom_call.1} parent=11 // pred_region
          _
        $region36: #{tpu_custom_call.1} parent=11 // pred_fallthru
          _
        // Predicated region
        $region37: #{tpu_custom_call.1} parent=11 // pred_check
          %p337 = pneg %p194
        $region38: #{tpu_custom_call.1} parent=11 // pred_check_branch
          %339 = sbr.rel (%p337) target = $region40
        $region39: #{tpu_custom_call.1} parent=11 // pred_region
          _
        $region40: #{tpu_custom_call.1} parent=11 // pred_fallthru
          _
        // Predicated region
        $region41: #{tpu_custom_call.1} parent=11 // pred_check
          %p340 = pneg %p215
        $region42: #{tpu_custom_call.1} parent=11 // pred_check_branch
          %342 = sbr.rel (%p340) target = $region44
        $region43: #{tpu_custom_call.1} parent=11 // pred_region
          _
        $region44: #{tpu_custom_call.1} parent=11 // pred_fallthru
          _
        // Predicated region
        $region45: #{tpu_custom_call.1} parent=11 // pred_check
          %p343 = pneg %p236
        $region46: #{tpu_custom_call.1} parent=11 // pred_check_branch
          %345 = sbr.rel (%p343) target = $region48
        $region47: #{tpu_custom_call.1} parent=11 // pred_region
          _
        $region48: #{tpu_custom_call.1} parent=11 // pred_fallthru
          _
        // Predicated region
        $region49: #{tpu_custom_call.1} parent=11 // pred_check
          %p346 = pneg %p257
        $region50: #{tpu_custom_call.1} parent=11 // pred_check_branch
          %348 = sbr.rel (%p346) target = $region52
        $region51: #{tpu_custom_call.1} parent=11 // pred_region
          _
        $region52: #{tpu_custom_call.1} parent=11 // pred_fallthru
          _
        // Predicated region
        $region53: #{tpu_custom_call.1} parent=11 // pred_check
          %p349 = pneg %p278
        $region54: #{tpu_custom_call.1} parent=11 // pred_check_branch
          %351 = sbr.rel (%p349) target = $region56
        $region55: #{tpu_custom_call.1} parent=11 // pred_region
          _
        $region56: #{tpu_custom_call.1} parent=11 // pred_fallthru
          _
      $region12: #{tpu_custom_call.1} parent=5 // pred_fallthru
        _
      %p352 = scmp.lt.s32.totalorder %s21, 2
      // Predicated region
      $region57: #{tpu_custom_call.1} parent=5 // pred_check
        %p353 = pneg %p352
      $region58: #{tpu_custom_call.1} parent=5 // pred_check_branch
        %355 = sbr.rel (%p353) target = $region60
      $region59: #{tpu_custom_call.1} parent=5 // pred_region
        // Predicated region
        $region61: #{tpu_custom_call.1} parent=59 // pred_check
          %p356 = pneg %p41
        $region62: #{tpu_custom_call.1} parent=59 // pred_check_branch
          %358 = sbr.rel (%p356) target = $region64
        $region63: #{tpu_custom_call.1} parent=59 // pred_region
          %s359 = sand.u32 %s31, 1
          %s360 = sand.u32 %s31, 1
          %s361 = smul.addr %s360, 64
          %s362 = scalar_lea.vmem [#allocation2], %s361
          %s363 = smul.u32 4, %s21
          %s364 = smul.addr %s363, 8
          %s365 = scalar_lea.vmem %s0, %s364
          // Predicated region
          $region65: #{tpu_custom_call.1} parent=63 // pred_check
            _
          $region66: #{tpu_custom_call.1} parent=63 // pred_check_branch
            %367 = sbr.rel (0) target = $region68
          $region67: #{tpu_custom_call.1} parent=63 // pred_region
            // Predicated region
            $region69: #{tpu_custom_call.1} parent=67 // pred_check
              _
            $region70: #{tpu_custom_call.1} parent=67 // pred_check_branch
              %369 = sbr.rel (0) target = $region72
            $region71: #{tpu_custom_call.1} parent=67 // pred_region
              loop: start=0, step=1, limit=1
              $region73: #{tpu_custom_call.1} parent=71 // loop_pre_header
                _
              $region74: #{tpu_custom_call.1} parent=71 // loop_header
                %s371 = sphi 0, %s375
                %p372 = scmp.ge.s32.totalorder %s371, 1
                %s376 = sphi %s365, %s365
                %s377 = sphi %s362, %s362
              $region75: #{tpu_custom_call.1} parent=71 // loop_header_branch
                %374 = sbr.rel (%p372) target = $region79
              $region76: #{tpu_custom_call.1} parent=71 // loop_body
                %v378 = vld [vmem:[%s376] sm:$0xff]
                %379 = vst [vmem:[%s377] sm:$0xff] %v378
                %v380 = vld [vmem:[%s376 + $0x8] sm:$0xff]
                %381 = vst [vmem:[%s377 + $0x8] sm:$0xff] %v380
                %v382 = vld [vmem:[%s376 + $0x10] sm:$0xff]
                %383 = vst [vmem:[%s377 + $0x10] sm:$0xff] %v382
                %v384 = vld [vmem:[%s376 + $0x18] sm:$0xff]
                %385 = vst [vmem:[%s377 + $0x18] sm:$0xff] %v384
                %v386 = vld [vmem:[%s376 + $0x40] sm:$0xff]
                %387 = vst [vmem:[%s377 + $0x20] sm:$0xff] %v386
                %v388 = vld [vmem:[%s376 + $0x48] sm:$0xff]
                %389 = vst [vmem:[%s377 + $0x28] sm:$0xff] %v388
                %v390 = vld [vmem:[%s376 + $0x50] sm:$0xff]
                %391 = vst [vmem:[%s377 + $0x30] sm:$0xff] %v390
                %v392 = vld [vmem:[%s376 + $0x58] sm:$0xff]
                %393 = vst [vmem:[%s377 + $0x38] sm:$0xff] %v392
              $region77: #{tpu_custom_call.1} parent=71 // loop_footer
                %s375 = sadd.s32 1, %s371
              $region78: #{tpu_custom_call.1} parent=71 // loop_footer_branch
                %370 = sbr.rel target = $region74
              $region79: #{tpu_custom_call.1} parent=71 // loop_exit
                _
            $region72: #{tpu_custom_call.1} parent=67 // pred_fallthru
              _
            // Predicated region
            $region80: #{tpu_custom_call.1} parent=67 // pred_check
              _
            $region81: #{tpu_custom_call.1} parent=67 // pred_check_branch
              %395 = sbr.rel target = $region83
            $region82: #{tpu_custom_call.1} parent=67 // pred_region
              _
            $region83: #{tpu_custom_call.1} parent=67 // pred_fallthru
              _
          $region68: #{tpu_custom_call.1} parent=63 // pred_fallthru
            _
          %396 = vnop
        $region64: #{tpu_custom_call.1} parent=59 // pred_fallthru
          _
      $region60: #{tpu_custom_call.1} parent=5 // pred_fallthru
        _
      %p397 = scmp.le.s32.totalorder 1, %s21
      %p398 = scmp.lt.s32.totalorder %s21, 3
      %p399 = pnand %p397, %p398
      %p400 = pneg %p399
      // Predicated region
      $region84: #{tpu_custom_call.1} parent=5 // pred_check
        _
      $region85: #{tpu_custom_call.1} parent=5 // pred_check_branch
        %402 = sbr.rel (%p399) target = $region87
      $region86: #{tpu_custom_call.1} parent=5 // pred_region
        %s403 = ssub.s32 %s21, 1
        %s404 = sand.u32 %s34, 1
        %s405 = sand.u32 %s34, 1
        %s406 = smul.addr %s405, 64
        %s407 = scalar_lea.vmem [#allocation2], %s406
        // Predicated region
        $region88: #{tpu_custom_call.1} parent=86 // pred_check
          %p408 = pneg %p47
        $region89: #{tpu_custom_call.1} parent=86 // pred_check_branch
          %410 = sbr.rel (%p408) target = $region91
        $region90: #{tpu_custom_call.1} parent=86 // pred_region
          _
        $region91: #{tpu_custom_call.1} parent=86 // pred_fallthru
          _
        %s411 = sand.u32 %s34, 1
        %s412 = sand.u32 %s34, 1
        %s413 = smul.addr %s412, 64
        %s414 = scalar_lea.vmem [#allocation2], %s413
        %p415 = pneg %p47
        %p416 = pneg %p44
        %p417 = pneg %p68
        %p418 = pneg %p65
        %p419 = pneg %p89
        %p420 = pneg %p86
        %p421 = pneg %p110
        %p422 = pneg %p107
        %p423 = pneg %p131
        %p424 = pneg %p128
        %p425 = pneg %p152
        %p426 = pneg %p149
        %p427 = pneg %p173
        %p428 = pneg %p170
        %p429 = pneg %p194
        %p430 = pneg %p191
        %p431 = pneg %p215
        %p432 = pneg %p212
        %p433 = pneg %p236
        %p434 = pneg %p233
        %p435 = pneg %p257
        %p436 = pneg %p254
        %p437 = pneg %p278
        %p438 = pneg %p275
        %p439 = pneg %p304
        %p440 = pneg %p301
        %s441 = sand.u32 %s291, 1
        %s442 = scalar_lea.sflag [#allocation4], %s441
        %s443 = sand.u32 %s291, 1
        %s444 = smul.addr %s443, 64
        %s445 = scalar_lea.vmem [#allocation3], %s444
        %s446 = smul.u32 4, %s26
        %s447 = smul.u32 4, %s26
        %v449 = vld [vmem:[%s407] sm:$0xff]
        %v450 = vld [vmem:[%s407 + $0x8] sm:$0xff]
        %v451 = vld [vmem:[%s407 + $0x10] sm:$0xff]
        %v452 = vld [vmem:[%s407 + $0x18] sm:$0xff]
        %v453 = vld [vmem:[%s407 + $0x20] sm:$0xff]
        %v454 = vld [vmem:[%s407 + $0x28] sm:$0xff]
        %v455 = vld [vmem:[%s407 + $0x30] sm:$0xff]
        %v456 = vld [vmem:[%s407 + $0x38] sm:$0xff]
        %v457 = vld [vmem:[%s1] sm:$0xf]
        %v458 = vld [vmem:[%s1 + $0x4] sm:$0xf]
        %v459 = vld [vmem:[%s1 + $0x8] sm:$0xf]
        %v460 = vld [vmem:[%s1 + $0xc] sm:$0xf]
        %v461 = vpack.c.bf16 %v453, %v449
        %v462 = vpack.c.bf16 %v454, %v450
        %v463 = vpack.c.bf16 %v455, %v451
        %v464 = vpack.c.bf16 %v456, %v452
        %v465 = vld [vmem:[%s2] sm:$0xff]
        %v466 = vld [vmem:[%s2 + $0x8] sm:$0xff]
        %v467 = vld [vmem:[%s2 + $0x10] sm:$0xff]
        %v468 = vld [vmem:[%s2 + $0x18] sm:$0xff]
        %470 = vset.pattern.permute.xlu0 0
        %471 = vperm.xlu0 %470, %v465
        %v472 = vpop.permute.xlu0 %471
        %475 = vset.pattern.permute.xlu0 0
        %476 = vperm.xlu0 %475, %v466
        %v477 = vpop.permute.xlu0 %476
        %480 = vset.pattern.permute.xlu0 0
        %481 = vperm.xlu0 %480, %v467
        %v482 = vpop.permute.xlu0 %481
        %485 = vset.pattern.permute.xlu0 0
        %486 = vperm.xlu0 %485, %v468
        %v487 = vpop.permute.xlu0 %486
        %v493 = vunpack.c.l.b16 %v457
        %v494 = vunpack.c.l.b16 %v458
        %v495 = vunpack.c.l.b16 %v459
        %v496 = vunpack.c.l.b16 %v460
        %v497 = vpack.c.b16 %v494, %v493
        %v498 = vpack.c.b16 %v496, %v495
        %vm499 = vcmask 130048
        %v501 = vsel %vm499, %v497, 0
        %v504 = vsel %vm499, %v498, 0
        %506 = vmatprep.subr.bf16.mxu0 0
        %507 = vmatpush1.bf16.msra.mxu0 0
        %508 = vmatprep.subr.bf16.mxu0 0
        %509 = vmatpush1.bf16.msra.mxu0 0
        %510 = vmatprep.subr.bf16.mxu0 0
        %511 = vmatpush1.bf16.msra.mxu0 0
        %512 = vmatprep.subr.bf16.mxu0 0
        %513 = vmatpush1.bf16.msra.mxu0 0
        %514 = vmatprep.subr.bf16.mxu0 0
        %515 = vmatpush1.bf16.msra.mxu0 0
        %516 = vmatprep.subr.bf16.mxu0 0
        %517 = vmatpush1.bf16.msra.mxu0 0
        %518 = vmatprep.subr.bf16.mxu0 0
        %519 = vmatpush1.bf16.msra.mxu0 0
        %520 = vmatprep.subr.bf16.mxu0 %v462
        %521 = vmatpush1.bf16.msra.mxu0 %v461
        %522 = vmatprep.subr.bf16.mxu0 0
        %523 = vmatpush2.bf16.msra.mxu0 0
        %524 = vmatprep.subr.bf16.mxu0 0
        %525 = vmatpush2.bf16.msra.mxu0 0
        %526 = vmatprep.subr.bf16.mxu0 0
        %527 = vmatpush2.bf16.msra.mxu0 0
        %528 = vmatprep.subr.bf16.mxu0 0
        %529 = vmatpush2.bf16.msra.mxu0 0
        %530 = vmatprep.subr.bf16.mxu0 0
        %531 = vmatpush2.bf16.msra.mxu0 0
        %532 = vmatprep.subr.bf16.mxu0 0
        %533 = vmatpush2.bf16.msra.mxu0 0
        %534 = vmatprep.subr.bf16.mxu0 0
        %535 = vmatpush2.bf16.msra.mxu0 0
        %536 = vmatprep.subr.bf16.mxu0 0
        %537 = vmatpush2.bf16.msra.mxu0 0
        %538 = vmatprep.mubr.bf16.mxu0 0
        %539 = vmatmul.mubr.bf16.gmra.mxu0 %v501
        %v540 = vpop.f32.mrf.mxu0
        %v541 = vadd.f32 %v472, %v540
        %v542 = vpop.f32.mrf.mxu0
        %v543 = vadd.f32 %v472, %v542
        %v544 = vpop.f32.mrf.mxu0
        %v545 = vadd.f32 %v477, %v544
        %v546 = vpop.f32.mrf.mxu0
        %v547 = vadd.f32 %v477, %v546
        %548 = vmatprep.mubr.bf16.mxu0 0
        %549 = vmatmul.mubr.bf16.gmra.mxu0 %v504
        %v550 = vpop.f32.mrf.mxu0
        %v551 = vadd.f32 %v482, %v550
        %v552 = vpop.f32.mrf.mxu0
        %v553 = vadd.f32 %v482, %v552
        %v554 = vpop.f32.mrf.mxu0
        %v555 = vadd.f32 %v487, %v554
        %v556 = vpop.f32.mrf.mxu0
        %v557 = vadd.f32 %v487, %v556
        %558 = vdwg.mxu0
        %559 = vmatprep.subr.bf16.mxu0 0
        %560 = vmatpush1.bf16.msra.mxu0 0
        %561 = vmatprep.subr.bf16.mxu0 0
        %562 = vmatpush1.bf16.msra.mxu0 0
        %563 = vmatprep.subr.bf16.mxu0 0
        %564 = vmatpush1.bf16.msra.mxu0 0
        %565 = vmatprep.subr.bf16.mxu0 0
        %566 = vmatpush1.bf16.msra.mxu0 0
        %567 = vmatprep.subr.bf16.mxu0 0
        %568 = vmatpush1.bf16.msra.mxu0 0
        %569 = vmatprep.subr.bf16.mxu0 0
        %570 = vmatpush1.bf16.msra.mxu0 0
        %571 = vmatprep.subr.bf16.mxu0 0
        %572 = vmatpush1.bf16.msra.mxu0 0
        %573 = vmatprep.subr.bf16.mxu0 %v464
        %574 = vmatpush1.bf16.msra.mxu0 %v463
        %575 = vmatprep.subr.bf16.mxu0 0
        %576 = vmatpush2.bf16.msra.mxu0 0
        %577 = vmatprep.subr.bf16.mxu0 0
        %578 = vmatpush2.bf16.msra.mxu0 0
        %579 = vmatprep.subr.bf16.mxu0 0
        %580 = vmatpush2.bf16.msra.mxu0 0
        %581 = vmatprep.subr.bf16.mxu0 0
        %582 = vmatpush2.bf16.msra.mxu0 0
        %583 = vmatprep.subr.bf16.mxu0 0
        %584 = vmatpush2.bf16.msra.mxu0 0
        %585 = vmatprep.subr.bf16.mxu0 0
        %586 = vmatpush2.bf16.msra.mxu0 0
        %587 = vmatprep.subr.bf16.mxu0 0
        %588 = vmatpush2.bf16.msra.mxu0 0
        %589 = vmatprep.subr.bf16.mxu0 0
        %590 = vmatpush2.bf16.msra.mxu0 0
        %591 = vmatprep.mubr.bf16.mxu0 0
        %592 = vmatmul.mubr.bf16.gmra.mxu0 %v501
        %v593 = vpop.f32.mrf.mxu0
        %v594 = vadd.f32 %v472, %v593
        %v595 = vpop.f32.mrf.mxu0
        %v596 = vadd.f32 %v472, %v595
        %v597 = vpop.f32.mrf.mxu0
        %v598 = vadd.f32 %v477, %v597
        %v599 = vpop.f32.mrf.mxu0
        %v600 = vadd.f32 %v477, %v599
        %601 = vmatprep.mubr.bf16.mxu0 0
        %602 = vmatmul.mubr.bf16.gmra.mxu0 %v504
        %v603 = vpop.f32.mrf.mxu0
        %v604 = vadd.f32 %v482, %v603
        %v605 = vpop.f32.mrf.mxu0
        %v606 = vadd.f32 %v482, %v605
        %v607 = vpop.f32.mrf.mxu0
        %v608 = vadd.f32 %v487, %v607
        %v609 = vpop.f32.mrf.mxu0
        %v610 = vadd.f32 %v487, %v609
        %611 = vdwg.mxu0
        %v612 = vmax.f32 %v541, 0.0
        %v613 = vmax.f32 %v543, 0.0
        %v614 = vmax.f32 %v594, 0.0
        %v615 = vmax.f32 %v596, 0.0
        %v616 = vmax.f32 %v545, 0.0
        %v617 = vmax.f32 %v547, 0.0
        %v618 = vmax.f32 %v598, 0.0
        %v619 = vmax.f32 %v600, 0.0
        %v620 = vmax.f32 %v551, 0.0
        %v621 = vmax.f32 %v553, 0.0
        %v622 = vmax.f32 %v604, 0.0
        %v623 = vmax.f32 %v606, 0.0
        %v624 = vmax.f32 %v555, 0.0
        %v625 = vmax.f32 %v557, 0.0
        %v626 = vmax.f32 %v608, 0.0
        %v627 = vmax.f32 %v610, 0.0
        %v628 = vld [vmem:[%s3] sm:$0xff]
        %v629 = vld [vmem:[%s3 + $0x8] sm:$0xff]
        %v630 = vld [vmem:[%s3 + $0x10] sm:$0xff]
        %v631 = vld [vmem:[%s3 + $0x18] sm:$0xff]
        %v632 = vld [vmem:[%s3 + $0x20] sm:$0xff]
        %v633 = vld [vmem:[%s3 + $0x28] sm:$0xff]
        %v634 = vld [vmem:[%s3 + $0x30] sm:$0xff]
        %v635 = vld [vmem:[%s3 + $0x38] sm:$0xff]
        %v636 = vld [vmem:[%s3 + $0x40] sm:$0xff]
        %v637 = vld [vmem:[%s3 + $0x48] sm:$0xff]
        %v638 = vld [vmem:[%s3 + $0x50] sm:$0xff]
        %v639 = vld [vmem:[%s3 + $0x58] sm:$0xff]
        %v640 = vld [vmem:[%s3 + $0x60] sm:$0xff]
        %v641 = vld [vmem:[%s3 + $0x68] sm:$0xff]
        %v642 = vld [vmem:[%s3 + $0x70] sm:$0xff]
        %v643 = vld [vmem:[%s3 + $0x78] sm:$0xff]
        %v644 = vld [vmem:[%s3 + $0x80] sm:$0xff]
        %v645 = vld [vmem:[%s3 + $0x88] sm:$0xff]
        %v646 = vld [vmem:[%s3 + $0x90] sm:$0xff]
        %v647 = vld [vmem:[%s3 + $0x98] sm:$0xff]
        %v648 = vld [vmem:[%s3 + $0xa0] sm:$0xff]
        %v649 = vld [vmem:[%s3 + $0xa8] sm:$0xff]
        %v650 = vld [vmem:[%s3 + $0xb0] sm:$0xff]
        %v651 = vld [vmem:[%s3 + $0xb8] sm:$0xff]
        %v652 = vld [vmem:[%s3 + $0xc0] sm:$0xff]
        %v653 = vld [vmem:[%s3 + $0xc8] sm:$0xff]
        %v654 = vld [vmem:[%s3 + $0xd0] sm:$0xff]
        %v655 = vld [vmem:[%s3 + $0xd8] sm:$0xff]
        %v656 = vld [vmem:[%s3 + $0xe0] sm:$0xff]
        %v657 = vld [vmem:[%s3 + $0xe8] sm:$0xff]
        %v658 = vld [vmem:[%s3 + $0xf0] sm:$0xff]
        %v659 = vld [vmem:[%s3 + $0xf8] sm:$0xff]
        %v660 = vld [vmem:[%s3 + $0x100] sm:$0xff]
        %v661 = vld [vmem:[%s3 + $0x108] sm:$0xff]
        %v662 = vld [vmem:[%s3 + $0x110] sm:$0xff]
        %v663 = vld [vmem:[%s3 + $0x118] sm:$0xff]
        %v664 = vld [vmem:[%s5] sm:$0xff]
        %v665 = vld [vmem:[%s5 + $0x8] sm:$0xff]
        %v666 = vld [vmem:[%s5 + $0x10] sm:$0xff]
        %v667 = vld [vmem:[%s5 + $0x18] sm:$0xff]
        %v668 = vld [vmem:[%s5 + $0x20] sm:$0x1]
        %v669 = vld [vmem:[%s5 + $0x28] sm:$0x1]
        %v670 = vld [vmem:[%s5 + $0x30] sm:$0x1]
        %v671 = vld [vmem:[%s5 + $0x38] sm:$0x1]
        %672 = vrot.lane.b32.xlu0 %v612, 17
        %v673 = vpop.permute.xlu0 %672
        %674 = vrot.lane.b32.xlu0 %v616, 17
        %v675 = vpop.permute.xlu0 %674
        %676 = vrot.lane.b32.xlu0 %v620, 17
        %v677 = vpop.permute.xlu0 %676
        %678 = vrot.lane.b32.xlu0 %v624, 17
        %v679 = vpop.permute.xlu0 %678
        %680 = vrot.lane.b32.xlu0 %v613, 17
        %v681 = vpop.permute.xlu0 %680
        %682 = vrot.lane.b32.xlu0 %v617, 17
        %v683 = vpop.permute.xlu0 %682
        %684 = vrot.lane.b32.xlu0 %v621, 17
        %v685 = vpop.permute.xlu0 %684
        %686 = vrot.lane.b32.xlu0 %v625, 17
        %v687 = vpop.permute.xlu0 %686
        %688 = vrot.lane.b32.xlu0 %v614, 17
        %v689 = vpop.permute.xlu0 %688
        %690 = vrot.lane.b32.xlu0 %v618, 17
        %v691 = vpop.permute.xlu0 %690
        %692 = vrot.lane.b32.xlu0 %v622, 17
        %v693 = vpop.permute.xlu0 %692
        %694 = vrot.lane.b32.xlu0 %v626, 17
        %v695 = vpop.permute.xlu0 %694
        %696 = vrot.lane.b32.xlu0 %v615, 17
        %v697 = vpop.permute.xlu0 %696
        %698 = vrot.lane.b32.xlu0 %v619, 17
        %v699 = vpop.permute.xlu0 %698
        %700 = vrot.lane.b32.xlu0 %v623, 17
        %v701 = vpop.permute.xlu0 %700
        %702 = vrot.lane.b32.xlu0 %v627, 17
        %v703 = vpop.permute.xlu0 %702
        %v704 = vlaneseq
        %v705 = vand.u32 %v704, 127
        %vm706 = vcmp.lt.s32.totalorder %v705, 17
        %v707 = vsel %vm706, %v689, %v697
        %v708 = vsel %vm706, %v691, %v699
        %v709 = vsel %vm706, %v693, %v701
        %v710 = vsel %vm706, %v695, %v703
        %v711 = vsel %vm706, %v681, %v689
        %v712 = vsel %vm706, %v683, %v691
        %v713 = vsel %vm706, %v685, %v693
        %v714 = vsel %vm706, %v687, %v695
        %v715 = vsel %vm706, %v673, %v681
        %v716 = vsel %vm706, %v675, %v683
        %v717 = vsel %vm706, %v677, %v685
        %v718 = vsel %vm706, %v679, %v687
        %v719 = vsel %vm706, %v697, %v673
        %v720 = vsel %vm706, %v699, %v675
        %v721 = vsel %vm706, %v701, %v677
        %v722 = vsel %vm706, %v703, %v679
        %724 = vset.pattern.permute.xlu0 0
        %725 = vperm.xlu0 %724, %v628
        %v726 = vpop.permute.xlu0 %725
        %729 = vset.pattern.permute.xlu0 0
        %730 = vperm.xlu0 %729, %v629
        %v731 = vpop.permute.xlu0 %730
        %734 = vset.pattern.permute.xlu0 0
        %735 = vperm.xlu0 %734, %v630
        %v736 = vpop.permute.xlu0 %735
        %739 = vset.pattern.permute.xlu0 0
        %740 = vperm.xlu0 %739, %v631
        %v741 = vpop.permute.xlu0 %740
        %v743 = vmul.f32 %v719, %v726
        %v744 = vmul.f32 %v715, %v726
        %v745 = vmul.f32 %v711, %v726
        %v746 = vmul.f32 %v707, %v726
        %v747 = vmul.f32 %v720, %v731
        %v748 = vmul.f32 %v716, %v731
        %v749 = vmul.f32 %v712, %v731
        %v750 = vmul.f32 %v708, %v731
        %v751 = vmul.f32 %v721, %v736
        %v752 = vmul.f32 %v717, %v736
        %v753 = vmul.f32 %v713, %v736
        %v754 = vmul.f32 %v709, %v736
        %v755 = vmul.f32 %v722, %v741
        %v756 = vmul.f32 %v718, %v741
        %v757 = vmul.f32 %v714, %v741
        %v758 = vmul.f32 %v710, %v741
        %v759 = vlaneseq
        %v760 = vshrl.u32 %v759, 7
        %v761 = vsub.s32 0, %v760
        %v762 = vrot.slane %v664, %v761
        %v763 = vlaneseq
        %v764 = vshrl.u32 %v763, 7
        %v765 = vsub.s32 0, %v764
        %v766 = vrot.slane %v665, %v765
        %v767 = vlaneseq
        %v768 = vshrl.u32 %v767, 7
        %v769 = vsub.s32 0, %v768
        %v770 = vrot.slane %v666, %v769
        %v771 = vlaneseq
        %v772 = vshrl.u32 %v771, 7
        %v773 = vsub.s32 0, %v772
        %v774 = vrot.slane %v667, %v773
        %v775 = vmul.f32 %v743, %v762
        %v776 = vmul.f32 %v744, %v766
        %v777 = vmul.f32 %v745, %v770
        %v778 = vmul.f32 %v746, %v774
        %v779 = vmul.f32 %v747, %v762
        %v780 = vmul.f32 %v748, %v766
        %v781 = vmul.f32 %v749, %v770
        %v782 = vmul.f32 %v750, %v774
        %v783 = vmul.f32 %v751, %v762
        %v784 = vmul.f32 %v752, %v766
        %v785 = vmul.f32 %v753, %v770
        %v786 = vmul.f32 %v754, %v774
        %v787 = vmul.f32 %v755, %v762
        %v788 = vmul.f32 %v756, %v766
        %v789 = vmul.f32 %v757, %v770
        %v790 = vmul.f32 %v758, %v774
        %v791 = vadd.f32 %v775, 0.0
        %v792 = vadd.f32 %v776, 0.0
        %v793 = vadd.f32 %v777, 0.0
        %v794 = vadd.f32 %v778, 0.0
        %v795 = vadd.f32 %v779, 0.0
        %v796 = vadd.f32 %v780, 0.0
        %v797 = vadd.f32 %v781, 0.0
        %v798 = vadd.f32 %v782, 0.0
        %v799 = vadd.f32 %v783, 0.0
        %v800 = vadd.f32 %v784, 0.0
        %v801 = vadd.f32 %v785, 0.0
        %v802 = vadd.f32 %v786, 0.0
        %v803 = vadd.f32 %v787, 0.0
        %v804 = vadd.f32 %v788, 0.0
        %v805 = vadd.f32 %v789, 0.0
        %v806 = vadd.f32 %v790, 0.0
        %807 = vrot.lane.b32.xlu0 %v612, 16
        %v808 = vpop.permute.xlu0 %807
        %809 = vrot.lane.b32.xlu0 %v616, 16
        %v810 = vpop.permute.xlu0 %809
        %811 = vrot.lane.b32.xlu0 %v620, 16
        %v812 = vpop.permute.xlu0 %811
        %813 = vrot.lane.b32.xlu0 %v624, 16
        %v814 = vpop.permute.xlu0 %813
        %815 = vrot.lane.b32.xlu0 %v613, 16
        %v816 = vpop.permute.xlu0 %815
        %817 = vrot.lane.b32.xlu0 %v617, 16
        %v818 = vpop.permute.xlu0 %817
        %819 = vrot.lane.b32.xlu0 %v621, 16
        %v820 = vpop.permute.xlu0 %819
        %821 = vrot.lane.b32.xlu0 %v625, 16
        %v822 = vpop.permute.xlu0 %821
        %823 = vrot.lane.b32.xlu0 %v614, 16
        %v824 = vpop.permute.xlu0 %823
        %825 = vrot.lane.b32.xlu0 %v618, 16
        %v826 = vpop.permute.xlu0 %825
        %827 = vrot.lane.b32.xlu0 %v622, 16
        %v828 = vpop.permute.xlu0 %827
        %829 = vrot.lane.b32.xlu0 %v626, 16
        %v830 = vpop.permute.xlu0 %829
        %831 = vrot.lane.b32.xlu0 %v615, 16
        %v832 = vpop.permute.xlu0 %831
        %833 = vrot.lane.b32.xlu0 %v619, 16
        %v834 = vpop.permute.xlu0 %833
        %835 = vrot.lane.b32.xlu0 %v623, 16
        %v836 = vpop.permute.xlu0 %835
        %837 = vrot.lane.b32.xlu0 %v627, 16
        %v838 = vpop.permute.xlu0 %837
        %vm839 = vcmp.lt.s32.totalorder %v705, 16
        %v840 = vsel %vm839, %v824, %v832
        %v841 = vsel %vm839, %v826, %v834
        %v842 = vsel %vm839, %v828, %v836
        %v843 = vsel %vm839, %v830, %v838
        %v844 = vsel %vm839, %v816, %v824
        %v845 = vsel %vm839, %v818, %v826
        %v846 = vsel %vm839, %v820, %v828
        %v847 = vsel %vm839, %v822, %v830
        %v848 = vsel %vm839, %v808, %v816
        %v849 = vsel %vm839, %v810, %v818
        %v850 = vsel %vm839, %v812, %v820
        %v851 = vsel %vm839, %v814, %v822
        %v852 = vsel %vm839, %v832, %v808
        %v853 = vsel %vm839, %v834, %v810
        %v854 = vsel %vm839, %v836, %v812
        %v855 = vsel %vm839, %v838, %v814
        %857 = vset.pattern.permute.xlu0 0
        %858 = vperm.xlu0 %857, %v632
        %v859 = vpop.permute.xlu0 %858
        %862 = vset.pattern.permute.xlu0 0
        %863 = vperm.xlu0 %862, %v633
        %v864 = vpop.permute.xlu0 %863
        %867 = vset.pattern.permute.xlu0 0
        %868 = vperm.xlu0 %867, %v634
        %v869 = vpop.permute.xlu0 %868
        %872 = vset.pattern.permute.xlu0 0
        %873 = vperm.xlu0 %872, %v635
        %v874 = vpop.permute.xlu0 %873
        %v876 = vmul.f32 %v852, %v859
        %v877 = vmul.f32 %v848, %v859
        %v878 = vmul.f32 %v844, %v859
        %v879 = vmul.f32 %v840, %v859
        %v880 = vmul.f32 %v853, %v864
        %v881 = vmul.f32 %v849, %v864
        %v882 = vmul.f32 %v845, %v864
        %v883 = vmul.f32 %v841, %v864
        %v884 = vmul.f32 %v854, %v869
        %v885 = vmul.f32 %v850, %v869
        %v886 = vmul.f32 %v846, %v869
        %v887 = vmul.f32 %v842, %v869
        %v888 = vmul.f32 %v855, %v874
        %v889 = vmul.f32 %v851, %v874
        %v890 = vmul.f32 %v847, %v874
        %v891 = vmul.f32 %v843, %v874
        %v892 = vlaneseq
        %v893 = vshrl.u32 %v892, 7
        %v894 = vsub.s32 1, %v893
        %v895 = vrot.slane %v664, %v894
        %v896 = vlaneseq
        %v897 = vshrl.u32 %v896, 7
        %v898 = vsub.s32 1, %v897
        %v899 = vrot.slane %v665, %v898
        %v900 = vlaneseq
        %v901 = vshrl.u32 %v900, 7
        %v902 = vsub.s32 1, %v901
        %v903 = vrot.slane %v666, %v902
        %v904 = vlaneseq
        %v905 = vshrl.u32 %v904, 7
        %v906 = vsub.s32 1, %v905
        %v907 = vrot.slane %v667, %v906
        %v908 = vmul.f32 %v876, %v895
        %v909 = vmul.f32 %v877, %v899
        %v910 = vmul.f32 %v878, %v903
        %v911 = vmul.f32 %v879, %v907
        %v912 = vmul.f32 %v880, %v895
        %v913 = vmul.f32 %v881, %v899
        %v914 = vmul.f32 %v882, %v903
        %v915 = vmul.f32 %v883, %v907
        %v916 = vmul.f32 %v884, %v895
        %v917 = vmul.f32 %v885, %v899
        %v918 = vmul.f32 %v886, %v903
        %v919 = vmul.f32 %v887, %v907
        %v920 = vmul.f32 %v888, %v895
        %v921 = vmul.f32 %v889, %v899
        %v922 = vmul.f32 %v890, %v903
        %v923 = vmul.f32 %v891, %v907
        %v924 = vadd.f32 %v791, %v908
        %v925 = vadd.f32 %v792, %v909
        %v926 = vadd.f32 %v793, %v910
        %v927 = vadd.f32 %v794, %v911
        %v928 = vadd.f32 %v795, %v912
        %v929 = vadd.f32 %v796, %v913
        %v930 = vadd.f32 %v797, %v914
        %v931 = vadd.f32 %v798, %v915
        %v932 = vadd.f32 %v799, %v916
        %v933 = vadd.f32 %v800, %v917
        %v934 = vadd.f32 %v801, %v918
        %v935 = vadd.f32 %v802, %v919
        %v936 = vadd.f32 %v803, %v920
        %v937 = vadd.f32 %v804, %v921
        %v938 = vadd.f32 %v805, %v922
        %v939 = vadd.f32 %v806, %v923
        %940 = vrot.lane.b32.xlu0 %v612, 15
        %v941 = vpop.permute.xlu0 %940
        %942 = vrot.lane.b32.xlu0 %v616, 15
        %v943 = vpop.permute.xlu0 %942
        %944 = vrot.lane.b32.xlu0 %v620, 15
        %v945 = vpop.permute.xlu0 %944
        %946 = vrot.lane.b32.xlu0 %v624, 15
        %v947 = vpop.permute.xlu0 %946
        %948 = vrot.lane.b32.xlu0 %v613, 15
        %v949 = vpop.permute.xlu0 %948
        %950 = vrot.lane.b32.xlu0 %v617, 15
        %v951 = vpop.permute.xlu0 %950
        %952 = vrot.lane.b32.xlu0 %v621, 15
        %v953 = vpop.permute.xlu0 %952
        %954 = vrot.lane.b32.xlu0 %v625, 15
        %v955 = vpop.permute.xlu0 %954
        %956 = vrot.lane.b32.xlu0 %v614, 15
        %v957 = vpop.permute.xlu0 %956
        %958 = vrot.lane.b32.xlu0 %v618, 15
        %v959 = vpop.permute.xlu0 %958
        %960 = vrot.lane.b32.xlu0 %v622, 15
        %v961 = vpop.permute.xlu0 %960
        %962 = vrot.lane.b32.xlu0 %v626, 15
        %v963 = vpop.permute.xlu0 %962
        %964 = vrot.lane.b32.xlu0 %v615, 15
        %v965 = vpop.permute.xlu0 %964
        %966 = vrot.lane.b32.xlu0 %v619, 15
        %v967 = vpop.permute.xlu0 %966
        %968 = vrot.lane.b32.xlu0 %v623, 15
        %v969 = vpop.permute.xlu0 %968
        %970 = vrot.lane.b32.xlu0 %v627, 15
        %v971 = vpop.permute.xlu0 %970
        %vm972 = vcmp.lt.s32.totalorder %v705, 15
        %v973 = vsel %vm972, %v957, %v965
        %v974 = vsel %vm972, %v959, %v967
        %v975 = vsel %vm972, %v961, %v969
        %v976 = vsel %vm972, %v963, %v971
        %v977 = vsel %vm972, %v949, %v957
        %v978 = vsel %vm972, %v951, %v959
        %v979 = vsel %vm972, %v953, %v961
        %v980 = vsel %vm972, %v955, %v963
        %v981 = vsel %vm972, %v941, %v949
        %v982 = vsel %vm972, %v943, %v951
        %v983 = vsel %vm972, %v945, %v953
        %v984 = vsel %vm972, %v947, %v955
        %v985 = vsel %vm972, %v965, %v941
        %v986 = vsel %vm972, %v967, %v943
        %v987 = vsel %vm972, %v969, %v945
        %v988 = vsel %vm972, %v971, %v947
        %990 = vset.pattern.permute.xlu0 0
        %991 = vperm.xlu0 %990, %v636
        %v992 = vpop.permute.xlu0 %991
        %995 = vset.pattern.permute.xlu0 0
        %996 = vperm.xlu0 %995, %v637
        %v997 = vpop.permute.xlu0 %996
        %1000 = vset.pattern.permute.xlu0 0
        %1001 = vperm.xlu0 %1000, %v638
        %v1002 = vpop.permute.xlu0 %1001
        %1005 = vset.pattern.permute.xlu0 0
        %1006 = vperm.xlu0 %1005, %v639
        %v1007 = vpop.permute.xlu0 %1006
        %v1009 = vmul.f32 %v985, %v992
        %v1010 = vmul.f32 %v981, %v992
        %v1011 = vmul.f32 %v977, %v992
        %v1012 = vmul.f32 %v973, %v992
        %v1013 = vmul.f32 %v986, %v997
        %v1014 = vmul.f32 %v982, %v997
        %v1015 = vmul.f32 %v978, %v997
        %v1016 = vmul.f32 %v974, %v997
        %v1017 = vmul.f32 %v987, %v1002
        %v1018 = vmul.f32 %v983, %v1002
        %v1019 = vmul.f32 %v979, %v1002
        %v1020 = vmul.f32 %v975, %v1002
        %v1021 = vmul.f32 %v988, %v1007
        %v1022 = vmul.f32 %v984, %v1007
        %v1023 = vmul.f32 %v980, %v1007
        %v1024 = vmul.f32 %v976, %v1007
        %v1025 = vlaneseq
        %v1026 = vshrl.u32 %v1025, 7
        %v1027 = vsub.s32 2, %v1026
        %v1028 = vrot.slane %v664, %v1027
        %v1029 = vlaneseq
        %v1030 = vshrl.u32 %v1029, 7
        %v1031 = vsub.s32 2, %v1030
        %v1032 = vrot.slane %v665, %v1031
        %v1033 = vlaneseq
        %v1034 = vshrl.u32 %v1033, 7
        %v1035 = vsub.s32 2, %v1034
        %v1036 = vrot.slane %v666, %v1035
        %v1037 = vlaneseq
        %v1038 = vshrl.u32 %v1037, 7
        %v1039 = vsub.s32 2, %v1038
        %v1040 = vrot.slane %v667, %v1039
        %v1041 = vmul.f32 %v1009, %v1028
        %v1042 = vmul.f32 %v1010, %v1032
        %v1043 = vmul.f32 %v1011, %v1036
        %v1044 = vmul.f32 %v1012, %v1040
        %v1045 = vmul.f32 %v1013, %v1028
        %v1046 = vmul.f32 %v1014, %v1032
        %v1047 = vmul.f32 %v1015, %v1036
        %v1048 = vmul.f32 %v1016, %v1040
        %v1049 = vmul.f32 %v1017, %v1028
        %v1050 = vmul.f32 %v1018, %v1032
        %v1051 = vmul.f32 %v1019, %v1036
        %v1052 = vmul.f32 %v1020, %v1040
        %v1053 = vmul.f32 %v1021, %v1028
        %v1054 = vmul.f32 %v1022, %v1032
        %v1055 = vmul.f32 %v1023, %v1036
        %v1056 = vmul.f32 %v1024, %v1040
        %v1057 = vadd.f32 %v924, %v1041
        %v1058 = vadd.f32 %v925, %v1042
        %v1059 = vadd.f32 %v926, %v1043
        %v1060 = vadd.f32 %v927, %v1044
        %v1061 = vadd.f32 %v928, %v1045
        %v1062 = vadd.f32 %v929, %v1046
        %v1063 = vadd.f32 %v930, %v1047
        %v1064 = vadd.f32 %v931, %v1048
        %v1065 = vadd.f32 %v932, %v1049
        %v1066 = vadd.f32 %v933, %v1050
        %v1067 = vadd.f32 %v934, %v1051
        %v1068 = vadd.f32 %v935, %v1052
        %v1069 = vadd.f32 %v936, %v1053
        %v1070 = vadd.f32 %v937, %v1054
        %v1071 = vadd.f32 %v938, %v1055
        %v1072 = vadd.f32 %v939, %v1056
        %1073 = vrot.lane.b32.xlu0 %v612, 1
        %v1074 = vpop.permute.xlu0 %1073
        %1075 = vrot.lane.b32.xlu0 %v616, 1
        %v1076 = vpop.permute.xlu0 %1075
        %1077 = vrot.lane.b32.xlu0 %v620, 1
        %v1078 = vpop.permute.xlu0 %1077
        %1079 = vrot.lane.b32.xlu0 %v624, 1
        %v1080 = vpop.permute.xlu0 %1079
        %1081 = vrot.lane.b32.xlu0 %v613, 1
        %v1082 = vpop.permute.xlu0 %1081
        %1083 = vrot.lane.b32.xlu0 %v617, 1
        %v1084 = vpop.permute.xlu0 %1083
        %1085 = vrot.lane.b32.xlu0 %v621, 1
        %v1086 = vpop.permute.xlu0 %1085
        %1087 = vrot.lane.b32.xlu0 %v625, 1
        %v1088 = vpop.permute.xlu0 %1087
        %1089 = vrot.lane.b32.xlu0 %v614, 1
        %v1090 = vpop.permute.xlu0 %1089
        %1091 = vrot.lane.b32.xlu0 %v618, 1
        %v1092 = vpop.permute.xlu0 %1091
        %1093 = vrot.lane.b32.xlu0 %v622, 1
        %v1094 = vpop.permute.xlu0 %1093
        %1095 = vrot.lane.b32.xlu0 %v626, 1
        %v1096 = vpop.permute.xlu0 %1095
        %1097 = vrot.lane.b32.xlu0 %v615, 1
        %v1098 = vpop.permute.xlu0 %1097
        %1099 = vrot.lane.b32.xlu0 %v619, 1
        %v1100 = vpop.permute.xlu0 %1099
        %1101 = vrot.lane.b32.xlu0 %v623, 1
        %v1102 = vpop.permute.xlu0 %1101
        %1103 = vrot.lane.b32.xlu0 %v627, 1
        %v1104 = vpop.permute.xlu0 %1103
        %vm1105 = vcmp.lt.s32.totalorder %v705, 1
        %v1106 = vsel %vm1105, %v1090, %v1098
        %v1107 = vsel %vm1105, %v1092, %v1100
        %v1108 = vsel %vm1105, %v1094, %v1102
        %v1109 = vsel %vm1105, %v1096, %v1104
        %v1110 = vsel %vm1105, %v1082, %v1090
        %v1111 = vsel %vm1105, %v1084, %v1092
        %v1112 = vsel %vm1105, %v1086, %v1094
        %v1113 = vsel %vm1105, %v1088, %v1096
        %v1114 = vsel %vm1105, %v1074, %v1082
        %v1115 = vsel %vm1105, %v1076, %v1084
        %v1116 = vsel %vm1105, %v1078, %v1086
        %v1117 = vsel %vm1105, %v1080, %v1088
        %v1118 = vsel %vm1105, %v1098, %v1074
        %v1119 = vsel %vm1105, %v1100, %v1076
        %v1120 = vsel %vm1105, %v1102, %v1078
        %v1121 = vsel %vm1105, %v1104, %v1080
        %1123 = vset.pattern.permute.xlu0 0
        %1124 = vperm.xlu0 %1123, %v640
        %v1125 = vpop.permute.xlu0 %1124
        %1128 = vset.pattern.permute.xlu0 0
        %1129 = vperm.xlu0 %1128, %v641
        %v1130 = vpop.permute.xlu0 %1129
        %1133 = vset.pattern.permute.xlu0 0
        %1134 = vperm.xlu0 %1133, %v642
        %v1135 = vpop.permute.xlu0 %1134
        %1138 = vset.pattern.permute.xlu0 0
        %1139 = vperm.xlu0 %1138, %v643
        %v1140 = vpop.permute.xlu0 %1139
        %v1142 = vmul.f32 %v1118, %v1125
        %v1143 = vmul.f32 %v1114, %v1125
        %v1144 = vmul.f32 %v1110, %v1125
        %v1145 = vmul.f32 %v1106, %v1125
        %v1146 = vmul.f32 %v1119, %v1130
        %v1147 = vmul.f32 %v1115, %v1130
        %v1148 = vmul.f32 %v1111, %v1130
        %v1149 = vmul.f32 %v1107, %v1130
        %v1150 = vmul.f32 %v1120, %v1135
        %v1151 = vmul.f32 %v1116, %v1135
        %v1152 = vmul.f32 %v1112, %v1135
        %v1153 = vmul.f32 %v1108, %v1135
        %v1154 = vmul.f32 %v1121, %v1140
        %v1155 = vmul.f32 %v1117, %v1140
        %v1156 = vmul.f32 %v1113, %v1140
        %v1157 = vmul.f32 %v1109, %v1140
        %v1158 = vlaneseq
        %v1159 = vshrl.u32 %v1158, 7
        %v1160 = vsub.s32 3, %v1159
        %v1161 = vrot.slane %v664, %v1160
        %v1162 = vlaneseq
        %v1163 = vshrl.u32 %v1162, 7
        %v1164 = vsub.s32 3, %v1163
        %v1165 = vrot.slane %v665, %v1164
        %v1166 = vlaneseq
        %v1167 = vshrl.u32 %v1166, 7
        %v1168 = vsub.s32 3, %v1167
        %v1169 = vrot.slane %v666, %v1168
        %v1170 = vlaneseq
        %v1171 = vshrl.u32 %v1170, 7
        %v1172 = vsub.s32 3, %v1171
        %v1173 = vrot.slane %v667, %v1172
        %v1174 = vmul.f32 %v1142, %v1161
        %v1175 = vmul.f32 %v1143, %v1165
        %v1176 = vmul.f32 %v1144, %v1169
        %v1177 = vmul.f32 %v1145, %v1173
        %v1178 = vmul.f32 %v1146, %v1161
        %v1179 = vmul.f32 %v1147, %v1165
        %v1180 = vmul.f32 %v1148, %v1169
        %v1181 = vmul.f32 %v1149, %v1173
        %v1182 = vmul.f32 %v1150, %v1161
        %v1183 = vmul.f32 %v1151, %v1165
        %v1184 = vmul.f32 %v1152, %v1169
        %v1185 = vmul.f32 %v1153, %v1173
        %v1186 = vmul.f32 %v1154, %v1161
        %v1187 = vmul.f32 %v1155, %v1165
        %v1188 = vmul.f32 %v1156, %v1169
        %v1189 = vmul.f32 %v1157, %v1173
        %v1190 = vadd.f32 %v1057, %v1174
        %v1191 = vadd.f32 %v1058, %v1175
        %v1192 = vadd.f32 %v1059, %v1176
        %v1193 = vadd.f32 %v1060, %v1177
        %v1194 = vadd.f32 %v1061, %v1178
        %v1195 = vadd.f32 %v1062, %v1179
        %v1196 = vadd.f32 %v1063, %v1180
        %v1197 = vadd.f32 %v1064, %v1181
        %v1198 = vadd.f32 %v1065, %v1182
        %v1199 = vadd.f32 %v1066, %v1183
        %v1200 = vadd.f32 %v1067, %v1184
        %v1201 = vadd.f32 %v1068, %v1185
        %v1202 = vadd.f32 %v1069, %v1186
        %v1203 = vadd.f32 %v1070, %v1187
        %v1204 = vadd.f32 %v1071, %v1188
        %v1205 = vadd.f32 %v1072, %v1189
        %1207 = vset.pattern.permute.xlu0 0
        %1208 = vperm.xlu0 %1207, %v644
        %v1209 = vpop.permute.xlu0 %1208
        %1212 = vset.pattern.permute.xlu0 0
        %1213 = vperm.xlu0 %1212, %v645
        %v1214 = vpop.permute.xlu0 %1213
        %1217 = vset.pattern.permute.xlu0 0
        %1218 = vperm.xlu0 %1217, %v646
        %v1219 = vpop.permute.xlu0 %1218
        %1222 = vset.pattern.permute.xlu0 0
        %1223 = vperm.xlu0 %1222, %v647
        %v1224 = vpop.permute.xlu0 %1223
        %v1226 = vmul.f32 %v612, %v1209
        %v1227 = vmul.f32 %v613, %v1209
        %v1228 = vmul.f32 %v614, %v1209
        %v1229 = vmul.f32 %v615, %v1209
        %v1230 = vmul.f32 %v616, %v1214
        %v1231 = vmul.f32 %v617, %v1214
        %v1232 = vmul.f32 %v618, %v1214
        %v1233 = vmul.f32 %v619, %v1214
        %v1234 = vmul.f32 %v620, %v1219
        %v1235 = vmul.f32 %v621, %v1219
        %v1236 = vmul.f32 %v622, %v1219
        %v1237 = vmul.f32 %v623, %v1219
        %v1238 = vmul.f32 %v624, %v1224
        %v1239 = vmul.f32 %v625, %v1224
        %v1240 = vmul.f32 %v626, %v1224
        %v1241 = vmul.f32 %v627, %v1224
        %v1242 = vadd.f32 %v1190, %v1226
        %v1243 = vadd.f32 %v1191, %v1227
        %v1244 = vadd.f32 %v1192, %v1228
        %v1245 = vadd.f32 %v1193, %v1229
        %v1246 = vadd.f32 %v1194, %v1230
        %v1247 = vadd.f32 %v1195, %v1231
        %v1248 = vadd.f32 %v1196, %v1232
        %v1249 = vadd.f32 %v1197, %v1233
        %v1250 = vadd.f32 %v1198, %v1234
        %v1251 = vadd.f32 %v1199, %v1235
        %v1252 = vadd.f32 %v1200, %v1236
        %v1253 = vadd.f32 %v1201, %v1237
        %v1254 = vadd.f32 %v1202, %v1238
        %v1255 = vadd.f32 %v1203, %v1239
        %v1256 = vadd.f32 %v1204, %v1240
        %v1257 = vadd.f32 %v1205, %v1241
        %1258 = vrot.lane.b32.xlu0 %v612, 127
        %v1259 = vpop.permute.xlu0 %1258
        %1260 = vrot.lane.b32.xlu0 %v616, 127
        %v1261 = vpop.permute.xlu0 %1260
        %1262 = vrot.lane.b32.xlu0 %v620, 127
        %v1263 = vpop.permute.xlu0 %1262
        %1264 = vrot.lane.b32.xlu0 %v624, 127
        %v1265 = vpop.permute.xlu0 %1264
        %1266 = vrot.lane.b32.xlu0 %v613, 127
        %v1267 = vpop.permute.xlu0 %1266
        %1268 = vrot.lane.b32.xlu0 %v617, 127
        %v1269 = vpop.permute.xlu0 %1268
        %1270 = vrot.lane.b32.xlu0 %v621, 127
        %v1271 = vpop.permute.xlu0 %1270
        %1272 = vrot.lane.b32.xlu0 %v625, 127
        %v1273 = vpop.permute.xlu0 %1272
        %1274 = vrot.lane.b32.xlu0 %v614, 127
        %v1275 = vpop.permute.xlu0 %1274
        %1276 = vrot.lane.b32.xlu0 %v618, 127
        %v1277 = vpop.permute.xlu0 %1276
        %1278 = vrot.lane.b32.xlu0 %v622, 127
        %v1279 = vpop.permute.xlu0 %1278
        %1280 = vrot.lane.b32.xlu0 %v626, 127
        %v1281 = vpop.permute.xlu0 %1280
        %1282 = vrot.lane.b32.xlu0 %v615, 127
        %v1283 = vpop.permute.xlu0 %1282
        %1284 = vrot.lane.b32.xlu0 %v619, 127
        %v1285 = vpop.permute.xlu0 %1284
        %1286 = vrot.lane.b32.xlu0 %v623, 127
        %v1287 = vpop.permute.xlu0 %1286
        %1288 = vrot.lane.b32.xlu0 %v627, 127
        %v1289 = vpop.permute.xlu0 %1288
        %vm1290 = vcmp.lt.s32.totalorder %v705, 127
        %v1291 = vsel %vm1290, %v1275, %v1283
        %v1292 = vsel %vm1290, %v1277, %v1285
        %v1293 = vsel %vm1290, %v1279, %v1287
        %v1294 = vsel %vm1290, %v1281, %v1289
        %v1295 = vsel %vm1290, %v1267, %v1275
        %v1296 = vsel %vm1290, %v1269, %v1277
        %v1297 = vsel %vm1290, %v1271, %v1279
        %v1298 = vsel %vm1290, %v1273, %v1281
        %v1299 = vsel %vm1290, %v1259, %v1267
        %v1300 = vsel %vm1290, %v1261, %v1269
        %v1301 = vsel %vm1290, %v1263, %v1271
        %v1302 = vsel %vm1290, %v1265, %v1273
        %v1303 = vsel %vm1290, %v1283, %v1259
        %v1304 = vsel %vm1290, %v1285, %v1261
        %v1305 = vsel %vm1290, %v1287, %v1263
        %v1306 = vsel %vm1290, %v1289, %v1265
        %1308 = vset.pattern.permute.xlu0 0
        %1309 = vperm.xlu0 %1308, %v648
        %v1310 = vpop.permute.xlu0 %1309
        %1313 = vset.pattern.permute.xlu0 0
        %1314 = vperm.xlu0 %1313, %v649
        %v1315 = vpop.permute.xlu0 %1314
        %1318 = vset.pattern.permute.xlu0 0
        %1319 = vperm.xlu0 %1318, %v650
        %v1320 = vpop.permute.xlu0 %1319
        %1323 = vset.pattern.permute.xlu0 0
        %1324 = vperm.xlu0 %1323, %v651
        %v1325 = vpop.permute.xlu0 %1324
        %v1327 = vmul.f32 %v1299, %v1310
        %v1328 = vmul.f32 %v1295, %v1310
        %v1329 = vmul.f32 %v1291, %v1310
        %v1330 = vmul.f32 %v1303, %v1310
        %v1331 = vmul.f32 %v1300, %v1315
        %v1332 = vmul.f32 %v1296, %v1315
        %v1333 = vmul.f32 %v1292, %v1315
        %v1334 = vmul.f32 %v1304, %v1315
        %v1335 = vmul.f32 %v1301, %v1320
        %v1336 = vmul.f32 %v1297, %v1320
        %v1337 = vmul.f32 %v1293, %v1320
        %v1338 = vmul.f32 %v1305, %v1320
        %v1339 = vmul.f32 %v1302, %v1325
        %v1340 = vmul.f32 %v1298, %v1325
        %v1341 = vmul.f32 %v1294, %v1325
        %v1342 = vmul.f32 %v1306, %v1325
        %v1343 = vlaneseq
        %v1344 = vshrl.u32 %v1343, 7
        %v1345 = vsub.s32 5, %v1344
        %v1346 = vrot.slane %v664, %v1345
        %v1347 = vlaneseq
        %v1348 = vshrl.u32 %v1347, 7
        %v1349 = vsub.s32 5, %v1348
        %v1350 = vrot.slane %v665, %v1349
        %v1351 = vlaneseq
        %v1352 = vshrl.u32 %v1351, 7
        %v1353 = vsub.s32 5, %v1352
        %v1354 = vrot.slane %v666, %v1353
        %v1355 = vlaneseq
        %v1356 = vshrl.u32 %v1355, 7
        %v1357 = vsub.s32 5, %v1356
        %v1358 = vrot.slane %v667, %v1357
        %v1359 = vmul.f32 %v1327, %v1346
        %v1360 = vmul.f32 %v1328, %v1350
        %v1361 = vmul.f32 %v1329, %v1354
        %v1362 = vmul.f32 %v1330, %v1358
        %v1363 = vmul.f32 %v1331, %v1346
        %v1364 = vmul.f32 %v1332, %v1350
        %v1365 = vmul.f32 %v1333, %v1354
        %v1366 = vmul.f32 %v1334, %v1358
        %v1367 = vmul.f32 %v1335, %v1346
        %v1368 = vmul.f32 %v1336, %v1350
        %v1369 = vmul.f32 %v1337, %v1354
        %v1370 = vmul.f32 %v1338, %v1358
        %v1371 = vmul.f32 %v1339, %v1346
        %v1372 = vmul.f32 %v1340, %v1350
        %v1373 = vmul.f32 %v1341, %v1354
        %v1374 = vmul.f32 %v1342, %v1358
        %v1375 = vadd.f32 %v1242, %v1359
        %v1376 = vadd.f32 %v1243, %v1360
        %v1377 = vadd.f32 %v1244, %v1361
        %v1378 = vadd.f32 %v1245, %v1362
        %v1379 = vadd.f32 %v1246, %v1363
        %v1380 = vadd.f32 %v1247, %v1364
        %v1381 = vadd.f32 %v1248, %v1365
        %v1382 = vadd.f32 %v1249, %v1366
        %v1383 = vadd.f32 %v1250, %v1367
        %v1384 = vadd.f32 %v1251, %v1368
        %v1385 = vadd.f32 %v1252, %v1369
        %v1386 = vadd.f32 %v1253, %v1370
        %v1387 = vadd.f32 %v1254, %v1371
        %v1388 = vadd.f32 %v1255, %v1372
        %v1389 = vadd.f32 %v1256, %v1373
        %v1390 = vadd.f32 %v1257, %v1374
        %1391 = vrot.lane.b32.xlu0 %v612, 113
        %v1392 = vpop.permute.xlu0 %1391
        %1393 = vrot.lane.b32.xlu0 %v616, 113
        %v1394 = vpop.permute.xlu0 %1393
        %1395 = vrot.lane.b32.xlu0 %v620, 113
        %v1396 = vpop.permute.xlu0 %1395
        %1397 = vrot.lane.b32.xlu0 %v624, 113
        %v1398 = vpop.permute.xlu0 %1397
        %1399 = vrot.lane.b32.xlu0 %v613, 113
        %v1400 = vpop.permute.xlu0 %1399
        %1401 = vrot.lane.b32.xlu0 %v617, 113
        %v1402 = vpop.permute.xlu0 %1401
        %1403 = vrot.lane.b32.xlu0 %v621, 113
        %v1404 = vpop.permute.xlu0 %1403
        %1405 = vrot.lane.b32.xlu0 %v625, 113
        %v1406 = vpop.permute.xlu0 %1405
        %1407 = vrot.lane.b32.xlu0 %v614, 113
        %v1408 = vpop.permute.xlu0 %1407
        %1409 = vrot.lane.b32.xlu0 %v618, 113
        %v1410 = vpop.permute.xlu0 %1409
        %1411 = vrot.lane.b32.xlu0 %v622, 113
        %v1412 = vpop.permute.xlu0 %1411
        %1413 = vrot.lane.b32.xlu0 %v626, 113
        %v1414 = vpop.permute.xlu0 %1413
        %1415 = vrot.lane.b32.xlu0 %v615, 113
        %v1416 = vpop.permute.xlu0 %1415
        %1417 = vrot.lane.b32.xlu0 %v619, 113
        %v1418 = vpop.permute.xlu0 %1417
        %1419 = vrot.lane.b32.xlu0 %v623, 113
        %v1420 = vpop.permute.xlu0 %1419
        %1421 = vrot.lane.b32.xlu0 %v627, 113
        %v1422 = vpop.permute.xlu0 %1421
        %vm1423 = vcmp.lt.s32.totalorder %v705, 113
        %v1424 = vsel %vm1423, %v1408, %v1416
        %v1425 = vsel %vm1423, %v1410, %v1418
        %v1426 = vsel %vm1423, %v1412, %v1420
        %v1427 = vsel %vm1423, %v1414, %v1422
        %v1428 = vsel %vm1423, %v1400, %v1408
        %v1429 = vsel %vm1423, %v1402, %v1410
        %v1430 = vsel %vm1423, %v1404, %v1412
        %v1431 = vsel %vm1423, %v1406, %v1414
        %v1432 = vsel %vm1423, %v1392, %v1400
        %v1433 = vsel %vm1423, %v1394, %v1402
        %v1434 = vsel %vm1423, %v1396, %v1404
        %v1435 = vsel %vm1423, %v1398, %v1406
        %v1436 = vsel %vm1423, %v1416, %v1392
        %v1437 = vsel %vm1423, %v1418, %v1394
        %v1438 = vsel %vm1423, %v1420, %v1396
        %v1439 = vsel %vm1423, %v1422, %v1398
        %1441 = vset.pattern.permute.xlu0 0
        %1442 = vperm.xlu0 %1441, %v652
        %v1443 = vpop.permute.xlu0 %1442
        %1446 = vset.pattern.permute.xlu0 0
        %1447 = vperm.xlu0 %1446, %v653
        %v1448 = vpop.permute.xlu0 %1447
        %1451 = vset.pattern.permute.xlu0 0
        %1452 = vperm.xlu0 %1451, %v654
        %v1453 = vpop.permute.xlu0 %1452
        %1456 = vset.pattern.permute.xlu0 0
        %1457 = vperm.xlu0 %1456, %v655
        %v1458 = vpop.permute.xlu0 %1457
        %v1460 = vmul.f32 %v1432, %v1443
        %v1461 = vmul.f32 %v1428, %v1443
        %v1462 = vmul.f32 %v1424, %v1443
        %v1463 = vmul.f32 %v1436, %v1443
        %v1464 = vmul.f32 %v1433, %v1448
        %v1465 = vmul.f32 %v1429, %v1448
        %v1466 = vmul.f32 %v1425, %v1448
        %v1467 = vmul.f32 %v1437, %v1448
        %v1468 = vmul.f32 %v1434, %v1453
        %v1469 = vmul.f32 %v1430, %v1453
        %v1470 = vmul.f32 %v1426, %v1453
        %v1471 = vmul.f32 %v1438, %v1453
        %v1472 = vmul.f32 %v1435, %v1458
        %v1473 = vmul.f32 %v1431, %v1458
        %v1474 = vmul.f32 %v1427, %v1458
        %v1475 = vmul.f32 %v1439, %v1458
        %v1476 = vlaneseq
        %v1477 = vshrl.u32 %v1476, 7
        %v1478 = vsub.s32 6, %v1477
        %v1479 = vrot.slane %v664, %v1478
        %v1480 = vlaneseq
        %v1481 = vshrl.u32 %v1480, 7
        %v1482 = vsub.s32 6, %v1481
        %v1483 = vrot.slane %v665, %v1482
        %v1484 = vlaneseq
        %v1485 = vshrl.u32 %v1484, 7
        %v1486 = vsub.s32 6, %v1485
        %v1487 = vrot.slane %v666, %v1486
        %v1488 = vlaneseq
        %v1489 = vshrl.u32 %v1488, 7
        %v1490 = vsub.s32 6, %v1489
        %v1491 = vrot.slane %v667, %v1490
        %v1492 = vmul.f32 %v1460, %v1479
        %v1493 = vmul.f32 %v1461, %v1483
        %v1494 = vmul.f32 %v1462, %v1487
        %v1495 = vmul.f32 %v1463, %v1491
        %v1496 = vmul.f32 %v1464, %v1479
        %v1497 = vmul.f32 %v1465, %v1483
        %v1498 = vmul.f32 %v1466, %v1487
        %v1499 = vmul.f32 %v1467, %v1491
        %v1500 = vmul.f32 %v1468, %v1479
        %v1501 = vmul.f32 %v1469, %v1483
        %v1502 = vmul.f32 %v1470, %v1487
        %v1503 = vmul.f32 %v1471, %v1491
        %v1504 = vmul.f32 %v1472, %v1479
        %v1505 = vmul.f32 %v1473, %v1483
        %v1506 = vmul.f32 %v1474, %v1487
        %v1507 = vmul.f32 %v1475, %v1491
        %v1508 = vadd.f32 %v1375, %v1492
        %v1509 = vadd.f32 %v1376, %v1493
        %v1510 = vadd.f32 %v1377, %v1494
        %v1511 = vadd.f32 %v1378, %v1495
        %v1512 = vadd.f32 %v1379, %v1496
        %v1513 = vadd.f32 %v1380, %v1497
        %v1514 = vadd.f32 %v1381, %v1498
        %v1515 = vadd.f32 %v1382, %v1499
        %v1516 = vadd.f32 %v1383, %v1500
        %v1517 = vadd.f32 %v1384, %v1501
        %v1518 = vadd.f32 %v1385, %v1502
        %v1519 = vadd.f32 %v1386, %v1503
        %v1520 = vadd.f32 %v1387, %v1504
        %v1521 = vadd.f32 %v1388, %v1505
        %v1522 = vadd.f32 %v1389, %v1506
        %v1523 = vadd.f32 %v1390, %v1507
        %1524 = vrot.lane.b32.xlu0 %v612, 112
        %v1525 = vpop.permute.xlu0 %1524
        %1526 = vrot.lane.b32.xlu0 %v616, 112
        %v1527 = vpop.permute.xlu0 %1526
        %1528 = vrot.lane.b32.xlu0 %v620, 112
        %v1529 = vpop.permute.xlu0 %1528
        %1530 = vrot.lane.b32.xlu0 %v624, 112
        %v1531 = vpop.permute.xlu0 %1530
        %1532 = vrot.lane.b32.xlu0 %v613, 112
        %v1533 = vpop.permute.xlu0 %1532
        %1534 = vrot.lane.b32.xlu0 %v617, 112
        %v1535 = vpop.permute.xlu0 %1534
        %1536 = vrot.lane.b32.xlu0 %v621, 112
        %v1537 = vpop.permute.xlu0 %1536
        %1538 = vrot.lane.b32.xlu0 %v625, 112
        %v1539 = vpop.permute.xlu0 %1538
        %1540 = vrot.lane.b32.xlu0 %v614, 112
        %v1541 = vpop.permute.xlu0 %1540
        %1542 = vrot.lane.b32.xlu0 %v618, 112
        %v1543 = vpop.permute.xlu0 %1542
        %1544 = vrot.lane.b32.xlu0 %v622, 112
        %v1545 = vpop.permute.xlu0 %1544
        %1546 = vrot.lane.b32.xlu0 %v626, 112
        %v1547 = vpop.permute.xlu0 %1546
        %1548 = vrot.lane.b32.xlu0 %v615, 112
        %v1549 = vpop.permute.xlu0 %1548
        %1550 = vrot.lane.b32.xlu0 %v619, 112
        %v1551 = vpop.permute.xlu0 %1550
        %1552 = vrot.lane.b32.xlu0 %v623, 112
        %v1553 = vpop.permute.xlu0 %1552
        %1554 = vrot.lane.b32.xlu0 %v627, 112
        %v1555 = vpop.permute.xlu0 %1554
        %vm1556 = vcmp.lt.s32.totalorder %v705, 112
        %v1557 = vsel %vm1556, %v1541, %v1549
        %v1558 = vsel %vm1556, %v1543, %v1551
        %v1559 = vsel %vm1556, %v1545, %v1553
        %v1560 = vsel %vm1556, %v1547, %v1555
        %v1561 = vsel %vm1556, %v1533, %v1541
        %v1562 = vsel %vm1556, %v1535, %v1543
        %v1563 = vsel %vm1556, %v1537, %v1545
        %v1564 = vsel %vm1556, %v1539, %v1547
        %v1565 = vsel %vm1556, %v1525, %v1533
        %v1566 = vsel %vm1556, %v1527, %v1535
        %v1567 = vsel %vm1556, %v1529, %v1537
        %v1568 = vsel %vm1556, %v1531, %v1539
        %v1569 = vsel %vm1556, %v1549, %v1525
        %v1570 = vsel %vm1556, %v1551, %v1527
        %v1571 = vsel %vm1556, %v1553, %v1529
        %v1572 = vsel %vm1556, %v1555, %v1531
        %1574 = vset.pattern.permute.xlu0 0
        %1575 = vperm.xlu0 %1574, %v656
        %v1576 = vpop.permute.xlu0 %1575
        %1579 = vset.pattern.permute.xlu0 0
        %1580 = vperm.xlu0 %1579, %v657
        %v1581 = vpop.permute.xlu0 %1580
        %1584 = vset.pattern.permute.xlu0 0
        %1585 = vperm.xlu0 %1584, %v658
        %v1586 = vpop.permute.xlu0 %1585
        %1589 = vset.pattern.permute.xlu0 0
        %1590 = vperm.xlu0 %1589, %v659
        %v1591 = vpop.permute.xlu0 %1590
        %v1593 = vmul.f32 %v1565, %v1576
        %v1594 = vmul.f32 %v1561, %v1576
        %v1595 = vmul.f32 %v1557, %v1576
        %v1596 = vmul.f32 %v1569, %v1576
        %v1597 = vmul.f32 %v1566, %v1581
        %v1598 = vmul.f32 %v1562, %v1581
        %v1599 = vmul.f32 %v1558, %v1581
        %v1600 = vmul.f32 %v1570, %v1581
        %v1601 = vmul.f32 %v1567, %v1586
        %v1602 = vmul.f32 %v1563, %v1586
        %v1603 = vmul.f32 %v1559, %v1586
        %v1604 = vmul.f32 %v1571, %v1586
        %v1605 = vmul.f32 %v1568, %v1591
        %v1606 = vmul.f32 %v1564, %v1591
        %v1607 = vmul.f32 %v1560, %v1591
        %v1608 = vmul.f32 %v1572, %v1591
        %v1609 = vlaneseq
        %v1610 = vshrl.u32 %v1609, 7
        %v1611 = vsub.s32 7, %v1610
        %v1612 = vrot.slane %v664, %v1611
        %v1613 = vlaneseq
        %v1614 = vshrl.u32 %v1613, 7
        %v1615 = vsub.s32 7, %v1614
        %v1616 = vrot.slane %v665, %v1615
        %v1617 = vlaneseq
        %v1618 = vshrl.u32 %v1617, 7
        %v1619 = vsub.s32 7, %v1618
        %v1620 = vrot.slane %v666, %v1619
        %v1621 = vlaneseq
        %v1622 = vshrl.u32 %v1621, 7
        %v1623 = vsub.s32 7, %v1622
        %v1624 = vrot.slane %v667, %v1623
        %v1625 = vmul.f32 %v1593, %v1612
        %v1626 = vmul.f32 %v1594, %v1616
        %v1627 = vmul.f32 %v1595, %v1620
        %v1628 = vmul.f32 %v1596, %v1624
        %v1629 = vmul.f32 %v1597, %v1612
        %v1630 = vmul.f32 %v1598, %v1616
        %v1631 = vmul.f32 %v1599, %v1620
        %v1632 = vmul.f32 %v1600, %v1624
        %v1633 = vmul.f32 %v1601, %v1612
        %v1634 = vmul.f32 %v1602, %v1616
        %v1635 = vmul.f32 %v1603, %v1620
        %v1636 = vmul.f32 %v1604, %v1624
        %v1637 = vmul.f32 %v1605, %v1612
        %v1638 = vmul.f32 %v1606, %v1616
        %v1639 = vmul.f32 %v1607, %v1620
        %v1640 = vmul.f32 %v1608, %v1624
        %v1641 = vadd.f32 %v1508, %v1625
        %v1642 = vadd.f32 %v1509, %v1626
        %v1643 = vadd.f32 %v1510, %v1627
        %v1644 = vadd.f32 %v1511, %v1628
        %v1645 = vadd.f32 %v1512, %v1629
        %v1646 = vadd.f32 %v1513, %v1630
        %v1647 = vadd.f32 %v1514, %v1631
        %v1648 = vadd.f32 %v1515, %v1632
        %v1649 = vadd.f32 %v1516, %v1633
        %v1650 = vadd.f32 %v1517, %v1634
        %v1651 = vadd.f32 %v1518, %v1635
        %v1652 = vadd.f32 %v1519, %v1636
        %v1653 = vadd.f32 %v1520, %v1637
        %v1654 = vadd.f32 %v1521, %v1638
        %v1655 = vadd.f32 %v1522, %v1639
        %v1656 = vadd.f32 %v1523, %v1640
        %1657 = vrot.lane.b32.xlu0 %v612, 111
        %v1658 = vpop.permute.xlu0 %1657
        %1659 = vrot.lane.b32.xlu0 %v616, 111
        %v1660 = vpop.permute.xlu0 %1659
        %1661 = vrot.lane.b32.xlu0 %v620, 111
        %v1662 = vpop.permute.xlu0 %1661
        %1663 = vrot.lane.b32.xlu0 %v624, 111
        %v1664 = vpop.permute.xlu0 %1663
        %1665 = vrot.lane.b32.xlu0 %v613, 111
        %v1666 = vpop.permute.xlu0 %1665
        %1667 = vrot.lane.b32.xlu0 %v617, 111
        %v1668 = vpop.permute.xlu0 %1667
        %1669 = vrot.lane.b32.xlu0 %v621, 111
        %v1670 = vpop.permute.xlu0 %1669
        %1671 = vrot.lane.b32.xlu0 %v625, 111
        %v1672 = vpop.permute.xlu0 %1671
        %1673 = vrot.lane.b32.xlu0 %v614, 111
        %v1674 = vpop.permute.xlu0 %1673
        %1675 = vrot.lane.b32.xlu0 %v618, 111
        %v1676 = vpop.permute.xlu0 %1675
        %1677 = vrot.lane.b32.xlu0 %v622, 111
        %v1678 = vpop.permute.xlu0 %1677
        %1679 = vrot.lane.b32.xlu0 %v626, 111
        %v1680 = vpop.permute.xlu0 %1679
        %1681 = vrot.lane.b32.xlu0 %v615, 111
        %v1682 = vpop.permute.xlu0 %1681
        %1683 = vrot.lane.b32.xlu0 %v619, 111
        %v1684 = vpop.permute.xlu0 %1683
        %1685 = vrot.lane.b32.xlu0 %v623, 111
        %v1686 = vpop.permute.xlu0 %1685
        %1687 = vrot.lane.b32.xlu0 %v627, 111
        %v1688 = vpop.permute.xlu0 %1687
        %vm1689 = vcmp.lt.s32.totalorder %v705, 111
        %v1690 = vsel %vm1689, %v1674, %v1682
        %v1691 = vsel %vm1689, %v1676, %v1684
        %v1692 = vsel %vm1689, %v1678, %v1686
        %v1693 = vsel %vm1689, %v1680, %v1688
        %v1694 = vsel %vm1689, %v1666, %v1674
        %v1695 = vsel %vm1689, %v1668, %v1676
        %v1696 = vsel %vm1689, %v1670, %v1678
        %v1697 = vsel %vm1689, %v1672, %v1680
        %v1698 = vsel %vm1689, %v1658, %v1666
        %v1699 = vsel %vm1689, %v1660, %v1668
        %v1700 = vsel %vm1689, %v1662, %v1670
        %v1701 = vsel %vm1689, %v1664, %v1672
        %v1702 = vsel %vm1689, %v1682, %v1658
        %v1703 = vsel %vm1689, %v1684, %v1660
        %v1704 = vsel %vm1689, %v1686, %v1662
        %v1705 = vsel %vm1689, %v1688, %v1664
        %1707 = vset.pattern.permute.xlu0 0
        %1708 = vperm.xlu0 %1707, %v660
        %v1709 = vpop.permute.xlu0 %1708
        %1712 = vset.pattern.permute.xlu0 0
        %1713 = vperm.xlu0 %1712, %v661
        %v1714 = vpop.permute.xlu0 %1713
        %1717 = vset.pattern.permute.xlu0 0
        %1718 = vperm.xlu0 %1717, %v662
        %v1719 = vpop.permute.xlu0 %1718
        %1722 = vset.pattern.permute.xlu0 0
        %1723 = vperm.xlu0 %1722, %v663
        %v1724 = vpop.permute.xlu0 %1723
        %v1726 = vmul.f32 %v1698, %v1709
        %v1727 = vmul.f32 %v1694, %v1709
        %v1728 = vmul.f32 %v1690, %v1709
        %v1729 = vmul.f32 %v1702, %v1709
        %v1730 = vmul.f32 %v1699, %v1714
        %v1731 = vmul.f32 %v1695, %v1714
        %v1732 = vmul.f32 %v1691, %v1714
        %v1733 = vmul.f32 %v1703, %v1714
        %v1734 = vmul.f32 %v1700, %v1719
        %v1735 = vmul.f32 %v1696, %v1719
        %v1736 = vmul.f32 %v1692, %v1719
        %v1737 = vmul.f32 %v1704, %v1719
        %v1738 = vmul.f32 %v1701, %v1724
        %v1739 = vmul.f32 %v1697, %v1724
        %v1740 = vmul.f32 %v1693, %v1724
        %v1741 = vmul.f32 %v1705, %v1724
        %v1742 = vlaneseq
        %v1743 = vshrl.u32 %v1742, 7
        %v1744 = vsub.s32 0, %v1743
        %v1745 = vrot.slane %v668, %v1744
        %v1746 = vlaneseq
        %v1747 = vshrl.u32 %v1746, 7
        %v1748 = vsub.s32 0, %v1747
        %v1749 = vrot.slane %v669, %v1748
        %v1750 = vlaneseq
        %v1751 = vshrl.u32 %v1750, 7
        %v1752 = vsub.s32 0, %v1751
        %v1753 = vrot.slane %v670, %v1752
        %v1754 = vlaneseq
        %v1755 = vshrl.u32 %v1754, 7
        %v1756 = vsub.s32 0, %v1755
        %v1757 = vrot.slane %v671, %v1756
        %v1758 = vmul.f32 %v1726, %v1745
        %v1759 = vmul.f32 %v1727, %v1749
        %v1760 = vmul.f32 %v1728, %v1753
        %v1761 = vmul.f32 %v1729, %v1757
        %v1762 = vmul.f32 %v1730, %v1745
        %v1763 = vmul.f32 %v1731, %v1749
        %v1764 = vmul.f32 %v1732, %v1753
        %v1765 = vmul.f32 %v1733, %v1757
        %v1766 = vmul.f32 %v1734, %v1745
        %v1767 = vmul.f32 %v1735, %v1749
        %v1768 = vmul.f32 %v1736, %v1753
        %v1769 = vmul.f32 %v1737, %v1757
        %v1770 = vmul.f32 %v1738, %v1745
        %v1771 = vmul.f32 %v1739, %v1749
        %v1772 = vmul.f32 %v1740, %v1753
        %v1773 = vmul.f32 %v1741, %v1757
        %v1774 = vadd.f32 %v1641, %v1758
        %v1775 = vadd.f32 %v1642, %v1759
        %v1776 = vadd.f32 %v1643, %v1760
        %v1777 = vadd.f32 %v1644, %v1761
        %v1778 = vadd.f32 %v1645, %v1762
        %v1779 = vadd.f32 %v1646, %v1763
        %v1780 = vadd.f32 %v1647, %v1764
        %v1781 = vadd.f32 %v1648, %v1765
        %v1782 = vadd.f32 %v1649, %v1766
        %v1783 = vadd.f32 %v1650, %v1767
        %v1784 = vadd.f32 %v1651, %v1768
        %v1785 = vadd.f32 %v1652, %v1769
        %v1786 = vadd.f32 %v1653, %v1770
        %v1787 = vadd.f32 %v1654, %v1771
        %v1788 = vadd.f32 %v1655, %v1772
        %v1789 = vadd.f32 %v1656, %v1773
        %v1790 = vld [vmem:[%s4] sm:$0xff]
        %v1791 = vld [vmem:[%s4 + $0x8] sm:$0xff]
        %v1792 = vld [vmem:[%s4 + $0x10] sm:$0xff]
        %v1793 = vld [vmem:[%s4 + $0x18] sm:$0xff]
        %1795 = vset.pattern.permute.xlu0 0
        %1796 = vperm.xlu0 %1795, %v1790
        %v1797 = vpop.permute.xlu0 %1796
        %1800 = vset.pattern.permute.xlu0 0
        %1801 = vperm.xlu0 %1800, %v1791
        %v1802 = vpop.permute.xlu0 %1801
        %1805 = vset.pattern.permute.xlu0 0
        %1806 = vperm.xlu0 %1805, %v1792
        %v1807 = vpop.permute.xlu0 %1806
        %1810 = vset.pattern.permute.xlu0 0
        %1811 = vperm.xlu0 %1810, %v1793
        %v1812 = vpop.permute.xlu0 %1811
        %v1814 = vadd.f32 %v1774, %v1797
        %v1815 = vadd.f32 %v1775, %v1797
        %v1816 = vadd.f32 %v1776, %v1797
        %v1817 = vadd.f32 %v1777, %v1797
        %v1818 = vadd.f32 %v1778, %v1802
        %v1819 = vadd.f32 %v1779, %v1802
        %v1820 = vadd.f32 %v1780, %v1802
        %v1821 = vadd.f32 %v1781, %v1802
        %v1822 = vadd.f32 %v1782, %v1807
        %v1823 = vadd.f32 %v1783, %v1807
        %v1824 = vadd.f32 %v1784, %v1807
        %v1825 = vadd.f32 %v1785, %v1807
        %v1826 = vadd.f32 %v1786, %v1812
        %v1827 = vadd.f32 %v1787, %v1812
        %v1828 = vadd.f32 %v1788, %v1812
        %v1829 = vadd.f32 %v1789, %v1812
        %v1830 = vmax.f32 %v1814, 0.0
        %v1831 = vmax.f32 %v1815, 0.0
        %v1832 = vmax.f32 %v1816, 0.0
        %v1833 = vmax.f32 %v1817, 0.0
        %v1834 = vmax.f32 %v1818, 0.0
        %v1835 = vmax.f32 %v1819, 0.0
        %v1836 = vmax.f32 %v1820, 0.0
        %v1837 = vmax.f32 %v1821, 0.0
        %v1838 = vmax.f32 %v1822, 0.0
        %v1839 = vmax.f32 %v1823, 0.0
        %v1840 = vmax.f32 %v1824, 0.0
        %v1841 = vmax.f32 %v1825, 0.0
        %v1842 = vmax.f32 %v1826, 0.0
        %v1843 = vmax.f32 %v1827, 0.0
        %v1844 = vmax.f32 %v1828, 0.0
        %v1845 = vmax.f32 %v1829, 0.0
        %v1846 = vpack.c.bf16 %v1834, %v1830
        %v1847 = vpack.c.bf16 %v1835, %v1831
        %v1848 = vpack.c.bf16 %v1836, %v1832
        %v1849 = vpack.c.bf16 %v1837, %v1833
        %v1850 = vpack.c.bf16 %v1842, %v1838
        %v1851 = vpack.c.bf16 %v1843, %v1839
        %v1852 = vpack.c.bf16 %v1844, %v1840
        %v1853 = vpack.c.bf16 %v1845, %v1841
        %v1854 = vld [vmem:[%s8] sm:$0xf]
        %v1855 = vld [vmem:[%s8 + $0x4] sm:$0xf]
        %v1856 = vld [vmem:[%s8 + $0x8] sm:$0xf]
        %v1857 = vld [vmem:[%s8 + $0xc] sm:$0xf]
        %v1858 = vld [vmem:[%s8 + $0x10] sm:$0xf]
        %v1859 = vld [vmem:[%s8 + $0x14] sm:$0xf]
        %v1860 = vld [vmem:[%s8 + $0x18] sm:$0xf]
        %v1861 = vld [vmem:[%s8 + $0x1c] sm:$0xf]
        %v1862 = vld [vmem:[%s8 + $0x20] sm:$0xf]
        %v1863 = vld [vmem:[%s8 + $0x24] sm:$0xf]
        %v1864 = vld [vmem:[%s8 + $0x28] sm:$0xf]
        %v1865 = vld [vmem:[%s8 + $0x2c] sm:$0xf]
        %v1866 = vld [vmem:[%s8 + $0x30] sm:$0xf]
        %v1867 = vld [vmem:[%s8 + $0x34] sm:$0xf]
        %v1868 = vld [vmem:[%s8 + $0x38] sm:$0xf]
        %v1869 = vld [vmem:[%s8 + $0x3c] sm:$0xf]
        %v1870 = vld [vmem:[%s8 + $0x40] sm:$0xf]
        %v1871 = vld [vmem:[%s8 + $0x44] sm:$0xf]
        %v1872 = vld [vmem:[%s8 + $0x48] sm:$0xf]
        %v1873 = vld [vmem:[%s8 + $0x4c] sm:$0xf]
        %v1874 = vld [vmem:[%s8 + $0x50] sm:$0xf]
        %v1875 = vld [vmem:[%s8 + $0x54] sm:$0xf]
        %v1876 = vld [vmem:[%s8 + $0x58] sm:$0xf]
        %v1877 = vld [vmem:[%s8 + $0x5c] sm:$0xf]
        %v1878 = vld [vmem:[%s8 + $0x60] sm:$0xf]
        %v1879 = vld [vmem:[%s8 + $0x64] sm:$0xf]
        %v1880 = vld [vmem:[%s8 + $0x68] sm:$0xf]
        %v1881 = vld [vmem:[%s8 + $0x6c] sm:$0xf]
        %v1882 = vld [vmem:[%s8 + $0x70] sm:$0xf]
        %v1883 = vld [vmem:[%s8 + $0x74] sm:$0xf]
        %v1884 = vld [vmem:[%s8 + $0x78] sm:$0xf]
        %v1885 = vld [vmem:[%s8 + $0x7c] sm:$0xf]
        %v1886 = vld [vmem:[%s8 + $0x80] sm:$0xf]
        %v1887 = vld [vmem:[%s8 + $0x84] sm:$0xf]
        %v1888 = vld [vmem:[%s8 + $0x88] sm:$0xf]
        %v1889 = vld [vmem:[%s8 + $0x8c] sm:$0xf]
        %v1890 = vld [vmem:[%s8 + $0x90] sm:$0xf]
        %v1891 = vld [vmem:[%s8 + $0x94] sm:$0xf]
        %v1892 = vld [vmem:[%s8 + $0x98] sm:$0xf]
        %v1893 = vld [vmem:[%s8 + $0x9c] sm:$0xf]
        %v1894 = vld [vmem:[%s8 + $0xa0] sm:$0xf]
        %v1895 = vld [vmem:[%s8 + $0xa4] sm:$0xf]
        %v1896 = vld [vmem:[%s8 + $0xa8] sm:$0xf]
        %v1897 = vld [vmem:[%s8 + $0xac] sm:$0xf]
        %v1898 = vld [vmem:[%s8 + $0xb0] sm:$0xf]
        %v1899 = vld [vmem:[%s8 + $0xb4] sm:$0xf]
        %v1900 = vld [vmem:[%s8 + $0xb8] sm:$0xf]
        %v1901 = vld [vmem:[%s8 + $0xbc] sm:$0xf]
        %v1902 = vld [vmem:[%s8 + $0xc0] sm:$0xf]
        %v1903 = vld [vmem:[%s8 + $0xc4] sm:$0xf]
        %v1904 = vld [vmem:[%s8 + $0xc8] sm:$0xf]
        %v1905 = vld [vmem:[%s8 + $0xcc] sm:$0xf]
        %v1906 = vld [vmem:[%s8 + $0xd0] sm:$0xf]
        %v1907 = vld [vmem:[%s8 + $0xd4] sm:$0xf]
        %v1908 = vld [vmem:[%s8 + $0xd8] sm:$0xf]
        %v1909 = vld [vmem:[%s8 + $0xdc] sm:$0xf]
        %v1910 = vld [vmem:[%s8 + $0xe0] sm:$0xf]
        %v1911 = vld [vmem:[%s8 + $0xe4] sm:$0xf]
        %v1912 = vld [vmem:[%s8 + $0xe8] sm:$0xf]
        %v1913 = vld [vmem:[%s8 + $0xec] sm:$0xf]
        %v1914 = vld [vmem:[%s8 + $0xf0] sm:$0xf]
        %v1915 = vld [vmem:[%s8 + $0xf4] sm:$0xf]
        %v1916 = vld [vmem:[%s8 + $0xf8] sm:$0xf]
        %v1917 = vld [vmem:[%s8 + $0xfc] sm:$0xf]
        %v1982 = vunpack.c.l.b16 %v1854
        %v1983 = vunpack.c.l.b16 %v1855
        %v1984 = vunpack.c.l.b16 %v1856
        %v1985 = vunpack.c.l.b16 %v1857
        %v1986 = vunpack.c.l.b16 %v1858
        %v1987 = vunpack.c.l.b16 %v1859
        %v1988 = vunpack.c.l.b16 %v1860
        %v1989 = vunpack.c.l.b16 %v1861
        %v1990 = vunpack.c.l.b16 %v1862
        %v1991 = vunpack.c.l.b16 %v1863
        %v1992 = vunpack.c.l.b16 %v1864
        %v1993 = vunpack.c.l.b16 %v1865
        %v1994 = vunpack.c.l.b16 %v1866
        %v1995 = vunpack.c.l.b16 %v1867
        %v1996 = vunpack.c.l.b16 %v1868
        %v1997 = vunpack.c.l.b16 %v1869
        %v1998 = vunpack.c.l.b16 %v1870
        %v1999 = vunpack.c.l.b16 %v1871
        %v2000 = vunpack.c.l.b16 %v1872
        %v2001 = vunpack.c.l.b16 %v1873
        %v2002 = vunpack.c.l.b16 %v1874
        %v2003 = vunpack.c.l.b16 %v1875
        %v2004 = vunpack.c.l.b16 %v1876
        %v2005 = vunpack.c.l.b16 %v1877
        %v2006 = vunpack.c.l.b16 %v1878
        %v2007 = vunpack.c.l.b16 %v1879
        %v2008 = vunpack.c.l.b16 %v1880
        %v2009 = vunpack.c.l.b16 %v1881
        %v2010 = vunpack.c.l.b16 %v1882
        %v2011 = vunpack.c.l.b16 %v1883
        %v2012 = vunpack.c.l.b16 %v1884
        %v2013 = vunpack.c.l.b16 %v1885
        %v2014 = vunpack.c.l.b16 %v1886
        %v2015 = vunpack.c.l.b16 %v1887
        %v2016 = vunpack.c.l.b16 %v1888
        %v2017 = vunpack.c.l.b16 %v1889
        %v2018 = vunpack.c.l.b16 %v1890
        %v2019 = vunpack.c.l.b16 %v1891
        %v2020 = vunpack.c.l.b16 %v1892
        %v2021 = vunpack.c.l.b16 %v1893
        %v2022 = vunpack.c.l.b16 %v1894
        %v2023 = vunpack.c.l.b16 %v1895
        %v2024 = vunpack.c.l.b16 %v1896
        %v2025 = vunpack.c.l.b16 %v1897
        %v2026 = vunpack.c.l.b16 %v1898
        %v2027 = vunpack.c.l.b16 %v1899
        %v2028 = vunpack.c.l.b16 %v1900
        %v2029 = vunpack.c.l.b16 %v1901
        %v2030 = vunpack.c.l.b16 %v1902
        %v2031 = vunpack.c.l.b16 %v1903
        %v2032 = vunpack.c.l.b16 %v1904
        %v2033 = vunpack.c.l.b16 %v1905
        %v2034 = vunpack.c.l.b16 %v1906
        %v2035 = vunpack.c.l.b16 %v1907
        %v2036 = vunpack.c.l.b16 %v1908
        %v2037 = vunpack.c.l.b16 %v1909
        %v2038 = vunpack.c.l.b16 %v1910
        %v2039 = vunpack.c.l.b16 %v1911
        %v2040 = vunpack.c.l.b16 %v1912
        %v2041 = vunpack.c.l.b16 %v1913
        %v2042 = vunpack.c.l.b16 %v1914
        %v2043 = vunpack.c.l.b16 %v1915
        %v2044 = vunpack.c.l.b16 %v1916
        %v2045 = vunpack.c.l.b16 %v1917
        %v2046 = vpack.c.b16 %v1983, %v1982
        %v2047 = vpack.c.b16 %v1985, %v1984
        %v2048 = vpack.c.b16 %v1987, %v1986
        %v2049 = vpack.c.b16 %v1989, %v1988
        %v2050 = vpack.c.b16 %v1991, %v1990
        %v2051 = vpack.c.b16 %v1993, %v1992
        %v2052 = vpack.c.b16 %v1995, %v1994
        %v2053 = vpack.c.b16 %v1997, %v1996
        %v2054 = vpack.c.b16 %v1999, %v1998
        %v2055 = vpack.c.b16 %v2001, %v2000
        %v2056 = vpack.c.b16 %v2003, %v2002
        %v2057 = vpack.c.b16 %v2005, %v2004
        %v2058 = vpack.c.b16 %v2007, %v2006
        %v2059 = vpack.c.b16 %v2009, %v2008
        %v2060 = vpack.c.b16 %v2011, %v2010
        %v2061 = vpack.c.b16 %v2013, %v2012
        %v2062 = vpack.c.b16 %v2015, %v2014
        %v2063 = vpack.c.b16 %v2017, %v2016
        %v2064 = vpack.c.b16 %v2019, %v2018
        %v2065 = vpack.c.b16 %v2021, %v2020
        %v2066 = vpack.c.b16 %v2023, %v2022
        %v2067 = vpack.c.b16 %v2025, %v2024
        %v2068 = vpack.c.b16 %v2027, %v2026
        %v2069 = vpack.c.b16 %v2029, %v2028
        %v2070 = vpack.c.b16 %v2031, %v2030
        %v2071 = vpack.c.b16 %v2033, %v2032
        %v2072 = vpack.c.b16 %v2035, %v2034
        %v2073 = vpack.c.b16 %v2037, %v2036
        %v2074 = vpack.c.b16 %v2039, %v2038
        %v2075 = vpack.c.b16 %v2041, %v2040
        %v2076 = vpack.c.b16 %v2043, %v2042
        %v2077 = vpack.c.b16 %v2045, %v2044
        %2110 = vmatprep.subr.bf16.mxu0 0
        %2111 = vmatpush1.bf16.msra.mxu0 %v2053
        %2112 = vmatprep.subr.bf16.mxu0 0
        %2113 = vmatpush1.bf16.msra.mxu0 %v2052
        %2114 = vmatprep.subr.bf16.mxu0 0
        %2115 = vmatpush1.bf16.msra.mxu0 %v2051
        %2116 = vmatprep.subr.bf16.mxu0 0
        %2117 = vmatpush1.bf16.msra.mxu0 %v2050
        %2118 = vmatprep.subr.bf16.mxu0 0
        %2119 = vmatpush1.bf16.msra.mxu0 %v2049
        %2120 = vmatprep.subr.bf16.mxu0 0
        %2121 = vmatpush1.bf16.msra.mxu0 %v2048
        %2122 = vmatprep.subr.bf16.mxu0 0
        %2123 = vmatpush1.bf16.msra.mxu0 %v2047
        %2124 = vmatprep.subr.bf16.mxu0 0
        %2125 = vmatpush1.bf16.msra.mxu0 %v2046
        %2126 = vmatprep.subr.bf16.mxu0 0
        %2127 = vmatpush2.bf16.msra.mxu0 %v2061
        %2128 = vmatprep.subr.bf16.mxu0 0
        %2129 = vmatpush2.bf16.msra.mxu0 %v2060
        %2130 = vmatprep.subr.bf16.mxu0 0
        %2131 = vmatpush2.bf16.msra.mxu0 %v2059
        %2132 = vmatprep.subr.bf16.mxu0 0
        %2133 = vmatpush2.bf16.msra.mxu0 %v2058
        %2134 = vmatprep.subr.bf16.mxu0 0
        %2135 = vmatpush2.bf16.msra.mxu0 %v2057
        %2136 = vmatprep.subr.bf16.mxu0 0
        %2137 = vmatpush2.bf16.msra.mxu0 %v2056
        %2138 = vmatprep.subr.bf16.mxu0 0
        %2139 = vmatpush2.bf16.msra.mxu0 %v2055
        %2140 = vmatprep.subr.bf16.mxu0 0
        %2141 = vmatpush2.bf16.msra.mxu0 %v2054
        %2142 = vmatprep.mubr.bf16.mxu0 %v1847
        %2143 = vmatmul.mubr.bf16.gmra.mxu0 %v1846
        %v2144 = vpop.f32.mrf.mxu0
        %v2145 = vadd.f32 0.0, %v2144
        %v2146 = vpop.f32.mrf.mxu0
        %v2147 = vpop.f32.mrf.mxu0
        %v2148 = vadd.f32 0.0, %v2147
        %v2149 = vpop.f32.mrf.mxu0
        %2150 = vmatprep.mubr.bf16.mxu0 %v1851
        %2151 = vmatmul.mubr.bf16.gmra.mxu0 %v1850
        %v2152 = vpop.f32.mrf.mxu0
        %v2153 = vadd.f32 0.0, %v2152
        %v2154 = vpop.f32.mrf.mxu0
        %v2155 = vpop.f32.mrf.mxu0
        %v2156 = vadd.f32 0.0, %v2155
        %v2157 = vpop.f32.mrf.mxu0
        %2158 = vdwg.mxu0
        %2159 = vmatprep.subr.bf16.mxu0 0
        %2160 = vmatpush1.bf16.msra.mxu0 %v2069
        %2161 = vmatprep.subr.bf16.mxu0 0
        %2162 = vmatpush1.bf16.msra.mxu0 %v2068
        %2163 = vmatprep.subr.bf16.mxu0 0
        %2164 = vmatpush1.bf16.msra.mxu0 %v2067
        %2165 = vmatprep.subr.bf16.mxu0 0
        %2166 = vmatpush1.bf16.msra.mxu0 %v2066
        %2167 = vmatprep.subr.bf16.mxu0 0
        %2168 = vmatpush1.bf16.msra.mxu0 %v2065
        %2169 = vmatprep.subr.bf16.mxu0 0
        %2170 = vmatpush1.bf16.msra.mxu0 %v2064
        %2171 = vmatprep.subr.bf16.mxu0 0
        %2172 = vmatpush1.bf16.msra.mxu0 %v2063
        %2173 = vmatprep.subr.bf16.mxu0 0
        %2174 = vmatpush1.bf16.msra.mxu0 %v2062
        %2175 = vmatprep.subr.bf16.mxu0 0
        %2176 = vmatpush2.bf16.msra.mxu0 %v2077
        %2177 = vmatprep.subr.bf16.mxu0 0
        %2178 = vmatpush2.bf16.msra.mxu0 %v2076
        %2179 = vmatprep.subr.bf16.mxu0 0
        %2180 = vmatpush2.bf16.msra.mxu0 %v2075
        %2181 = vmatprep.subr.bf16.mxu0 0
        %2182 = vmatpush2.bf16.msra.mxu0 %v2074
        %2183 = vmatprep.subr.bf16.mxu0 0
        %2184 = vmatpush2.bf16.msra.mxu0 %v2073
        %2185 = vmatprep.subr.bf16.mxu0 0
        %2186 = vmatpush2.bf16.msra.mxu0 %v2072
        %2187 = vmatprep.subr.bf16.mxu0 0
        %2188 = vmatpush2.bf16.msra.mxu0 %v2071
        %2189 = vmatprep.subr.bf16.mxu0 0
        %2190 = vmatpush2.bf16.msra.mxu0 %v2070
        %2191 = vmatprep.mubr.bf16.mxu0 %v1849
        %2192 = vmatmul.mubr.bf16.gmra.mxu0 %v1848
        %v2193 = vpop.f32.mrf.mxu0
        %v2194 = vadd.f32 %v2145, %v2193
        %v2195 = vpop.f32.mrf.mxu0
        %v2196 = vpop.f32.mrf.mxu0
        %v2197 = vadd.f32 %v2148, %v2196
        %v2198 = vpop.f32.mrf.mxu0
        %2199 = vmatprep.mubr.bf16.mxu0 %v1853
        %2200 = vmatmul.mubr.bf16.gmra.mxu0 %v1852
        %v2201 = vpop.f32.mrf.mxu0
        %v2202 = vadd.f32 %v2153, %v2201
        %v2203 = vpop.f32.mrf.mxu0
        %v2204 = vpop.f32.mrf.mxu0
        %v2205 = vadd.f32 %v2156, %v2204
        %v2206 = vpop.f32.mrf.mxu0
        %2207 = vdwg.mxu0
        %v2208 = vld [vmem:[%s6] sm:$0xf]
        %v2209 = vpack.c.bf16 %v2197, %v2194
        %v2210 = vpack.c.bf16 %v2205, %v2202
        %vm2211 = vcmask 261120
        %v2213 = vsel %vm2211, %v2208, 0
        %2215 = vmatprep.subr.bf16.mxu0 0
        %2216 = vmatpush1.bf16.msra.mxu0 0
        %2217 = vmatprep.subr.bf16.mxu0 0
        %2218 = vmatpush1.bf16.msra.mxu0 0
        %2219 = vmatprep.subr.bf16.mxu0 0
        %2220 = vmatpush1.bf16.msra.mxu0 0
        %2221 = vmatprep.subr.bf16.mxu0 0
        %2222 = vmatpush1.bf16.msra.mxu0 0
        %2223 = vmatprep.subr.bf16.mxu0 0
        %2224 = vmatpush1.bf16.msra.mxu0 0
        %2225 = vmatprep.subr.bf16.mxu0 0
        %2226 = vmatpush1.bf16.msra.mxu0 0
        %2227 = vmatprep.subr.bf16.mxu0 0
        %2228 = vmatpush1.bf16.msra.mxu0 %v2210
        %2229 = vmatprep.subr.bf16.mxu0 0
        %2230 = vmatpush1.bf16.msra.mxu0 %v2209
        %2231 = vmatprep.subr.bf16.mxu0 0
        %2232 = vmatpush2.bf16.msra.mxu0 0
        %2233 = vmatprep.subr.bf16.mxu0 0
        %2234 = vmatpush2.bf16.msra.mxu0 0
        %2235 = vmatprep.subr.bf16.mxu0 0
        %2236 = vmatpush2.bf16.msra.mxu0 0
        %2237 = vmatprep.subr.bf16.mxu0 0
        %2238 = vmatpush2.bf16.msra.mxu0 0
        %2239 = vmatprep.subr.bf16.mxu0 0
        %2240 = vmatpush2.bf16.msra.mxu0 0
        %2241 = vmatprep.subr.bf16.mxu0 0
        %2242 = vmatpush2.bf16.msra.mxu0 0
        %2243 = vmatprep.subr.bf16.mxu0 0
        %2244 = vmatpush2.bf16.msra.mxu0 0
        %2245 = vmatprep.subr.bf16.mxu0 0
        %2246 = vmatpush2.bf16.msra.mxu0 0
        %2247 = vmatprep.mubr.bf16.mxu0 0
        %2248 = vmatmul.mubr.bf16.gmra.mxu0 %v2213
        %v2249 = vpop.f32.mrf.mxu0
        %v2250 = vadd.f32 0.0, %v2249
        %v2251 = vpop.f32.mrf.mxu0
        %v2252 = vpop.f32.mrf.mxu0
        %v2253 = vpop.f32.mrf.mxu0
        %2254 = vdwg.mxu0
        %v2255 = vmax.f32 %v2250, 0.0
        %v2256 = vld [vmem:[%s7] sm:$0xf]
        %v2257 = vld [vmem:[%s7 + $0x4] sm:$0xf]
        %v2258 = vld [vmem:[%s7 + $0x8] sm:$0xf]
        %v2259 = vld [vmem:[%s7 + $0xc] sm:$0xf]
        %v2260 = vpack.c.bf16 %v2255, %v2255
        %v2265 = vunpack.c.l.b16 %v2256
        %v2266 = vunpack.c.l.b16 %v2257
        %v2267 = vunpack.c.l.b16 %v2258
        %v2268 = vunpack.c.l.b16 %v2259
        %v2269 = vpack.c.b16 %v2266, %v2265
        %v2270 = vpack.c.b16 %v2268, %v2267
        %vm2271 = vcmask 64512
        %v2273 = vsel %vm2271, %v2269, 0
        %v2276 = vsel %vm2271, %v2270, 0
        %vm2278 = vcmask 1043456
        %v2280 = vsel %vm2278, %v2260, 0
        %2282 = vmatprep.subr.bf16.mxu0 0
        %2283 = vmatpush1.bf16.msra.mxu0 0
        %2284 = vmatprep.subr.bf16.mxu0 0
        %2285 = vmatpush1.bf16.msra.mxu0 0
        %2286 = vmatprep.subr.bf16.mxu0 0
        %2287 = vmatpush1.bf16.msra.mxu0 0
        %2288 = vmatprep.subr.bf16.mxu0 0
        %2289 = vmatpush1.bf16.msra.mxu0 0
        %2290 = vmatprep.subr.bf16.mxu0 0
        %2291 = vmatpush1.bf16.msra.mxu0 0
        %2292 = vmatprep.subr.bf16.mxu0 0
        %2293 = vmatpush1.bf16.msra.mxu0 0
        %2294 = vmatprep.subr.bf16.mxu0 0
        %2295 = vmatpush1.bf16.msra.mxu0 0
        %2296 = vmatprep.subr.bf16.mxu0 0
        %2297 = vmatpush1.bf16.msra.mxu0 %v2280
        %2298 = vmatprep.subr.bf16.mxu0 0
        %2299 = vmatpush2.bf16.msra.mxu0 0
        %2300 = vmatprep.subr.bf16.mxu0 0
        %2301 = vmatpush2.bf16.msra.mxu0 0
        %2302 = vmatprep.subr.bf16.mxu0 0
        %2303 = vmatpush2.bf16.msra.mxu0 0
        %2304 = vmatprep.subr.bf16.mxu0 0
        %2305 = vmatpush2.bf16.msra.mxu0 0
        %2306 = vmatprep.subr.bf16.mxu0 0
        %2307 = vmatpush2.bf16.msra.mxu0 0
        %2308 = vmatprep.subr.bf16.mxu0 0
        %2309 = vmatpush2.bf16.msra.mxu0 0
        %2310 = vmatprep.subr.bf16.mxu0 0
        %2311 = vmatpush2.bf16.msra.mxu0 0
        %2312 = vmatprep.subr.bf16.mxu0 0
        %2313 = vmatpush2.bf16.msra.mxu0 0
        %2314 = vmatprep.mubr.bf16.mxu0 0
        %2315 = vmatmul.mubr.bf16.gmra.mxu0 %v2273
        %v2316 = vpop.f32.mrf.mxu0
        %v2317 = vadd.f32 3.0, %v2316
        %v2318 = vpop.f32.mrf.mxu0
        %v2319 = vpop.f32.mrf.mxu0
        %v2320 = vadd.f32 3.0, %v2319
        %v2321 = vpop.f32.mrf.mxu0
        %2322 = vmatprep.mubr.bf16.mxu0 0
        %2323 = vmatmul.mubr.bf16.gmra.mxu0 %v2276
        %v2324 = vpop.f32.mrf.mxu0
        %v2325 = vadd.f32 3.0, %v2324
        %v2326 = vpop.f32.mrf.mxu0
        %v2327 = vpop.f32.mrf.mxu0
        %v2328 = vadd.f32 3.0, %v2327
        %v2329 = vpop.f32.mrf.mxu0
        %2330 = vdwg.mxu0
        %v2331 = vrcp.pop 6.0
        %v2332 = vmul.f32 %v2317, %v2331
        %v2333 = vmul.f32 %v2320, %v2331
        %v2334 = vmul.f32 %v2325, %v2331
        %v2335 = vmul.f32 %v2328, %v2331
        %v2336 = vmax.f32 %v2332, 0.0
        %v2337 = vmax.f32 %v2333, 0.0
        %v2338 = vmax.f32 %v2334, 0.0
        %v2339 = vmax.f32 %v2335, 0.0
        %v2340 = vmin.f32 %v2336, 1.0
        %v2341 = vmin.f32 %v2337, 1.0
        %v2342 = vmin.f32 %v2338, 1.0
        %v2343 = vmin.f32 %v2339, 1.0
        %v2344 = vpack.c.bf16 %v2341, %v2340
        %v2345 = vpack.c.bf16 %v2343, %v2342
        %v2346 = vld [vmem:[%s9] sm:$0xf]
        %v2349 = vunpack.c.l.s4 1966171168
        %v2350 = vunpack.c.0.s8 %v2349
        %v2351 = vlaneseq
        %v2352 = vshrl.u32 %v2351, 7
        %v2353 = vsub.s32 %v2350, %v2352
        %v2354 = vrot.slane %v2346, %v2353
        %v2355 = vcombine.high %v2354, %v2354
        %v2357 = vunpack.c.l.s4 1966171168
        %v2358 = vunpack.c.0.s8 %v2357
        %v2359 = vlaneseq
        %v2360 = vshrl.u32 %v2359, 7
        %v2361 = vsub.s32 %v2358, %v2360
        %v2362 = vrot.slane %v2354, %v2361
        %v2364 = vunpack.c.l.s4 1966171168
        %v2365 = vunpack.c.0.s8 %v2364
        %v2366 = vlaneseq
        %v2367 = vshrl.u32 %v2366, 7
        %v2368 = vsub.s32 %v2365, %v2367
        %v2369 = vrot.slane %v2355, %v2368
        %v2370 = vcombine.high %v2362, %v2362
        %v2371 = vcombine.high %v2369, %v2369
        %vm2372 = vcmask 15360
        %v2374 = vsel %vm2372, %v2344, 0
        %v2377 = vsel %vm2372, %v2345, 0
        %vm2379 = vcmask 1040384
        %v2381 = vsel %vm2379, %v2362, 0
        %v2384 = vsel %vm2379, %v2369, 0
        %v2387 = vsel %vm2379, %v2370, 0
        %v2390 = vsel %vm2379, %v2371, 0
        %2392 = vmatprep.subr.bf16.mxu0 0
        %2393 = vmatpush1.bf16.msra.mxu0 0
        %2394 = vmatprep.subr.bf16.mxu0 0
        %2395 = vmatpush1.bf16.msra.mxu0 0
        %2396 = vmatprep.subr.bf16.mxu0 0
        %2397 = vmatpush1.bf16.msra.mxu0 0
        %2398 = vmatprep.subr.bf16.mxu0 0
        %2399 = vmatpush1.bf16.msra.mxu0 0
        %2400 = vmatprep.subr.bf16.mxu0 0
        %2401 = vmatpush1.bf16.msra.mxu0 0
        %2402 = vmatprep.subr.bf16.mxu0 0
        %2403 = vmatpush1.bf16.msra.mxu0 0
        %2404 = vmatprep.subr.bf16.mxu0 0
        %2405 = vmatpush1.bf16.msra.mxu0 0
        %2406 = vmatprep.subr.bf16.mxu0 %v2384
        %2407 = vmatpush1.bf16.msra.mxu0 %v2381
        %2408 = vmatprep.subr.bf16.mxu0 0
        %2409 = vmatpush2.bf16.msra.mxu0 0
        %2410 = vmatprep.subr.bf16.mxu0 0
        %2411 = vmatpush2.bf16.msra.mxu0 0
        %2412 = vmatprep.subr.bf16.mxu0 0
        %2413 = vmatpush2.bf16.msra.mxu0 0
        %2414 = vmatprep.subr.bf16.mxu0 0
        %2415 = vmatpush2.bf16.msra.mxu0 0
        %2416 = vmatprep.subr.bf16.mxu0 0
        %2417 = vmatpush2.bf16.msra.mxu0 0
        %2418 = vmatprep.subr.bf16.mxu0 0
        %2419 = vmatpush2.bf16.msra.mxu0 0
        %2420 = vmatprep.subr.bf16.mxu0 0
        %2421 = vmatpush2.bf16.msra.mxu0 0
        %2422 = vmatprep.subr.bf16.mxu0 0
        %2423 = vmatpush2.bf16.msra.mxu0 0
        %2424 = vmatprep.mubr.bf16.mxu0 0
        %2425 = vmatmul.mubr.bf16.gmra.mxu0 %v2374
        %v2426 = vpop.f32.mrf.mxu0
        %v2427 = vadd.f32 0.0, %v2426
        %v2428 = vpop.f32.mrf.mxu0
        %v2429 = vadd.f32 0.0, %v2428
        %v2430 = vpop.f32.mrf.mxu0
        %v2431 = vadd.f32 0.0, %v2430
        %v2432 = vpop.f32.mrf.mxu0
        %v2433 = vadd.f32 0.0, %v2432
        %2434 = vmatprep.mubr.bf16.mxu0 0
        %2435 = vmatmul.mubr.bf16.gmra.mxu0 %v2377
        %v2436 = vpop.f32.mrf.mxu0
        %v2437 = vadd.f32 0.0, %v2436
        %v2438 = vpop.f32.mrf.mxu0
        %v2439 = vadd.f32 0.0, %v2438
        %v2440 = vpop.f32.mrf.mxu0
        %v2441 = vadd.f32 0.0, %v2440
        %v2442 = vpop.f32.mrf.mxu0
        %v2443 = vadd.f32 0.0, %v2442
        %2444 = vdwg.mxu0
        %2445 = vmatprep.subr.bf16.mxu0 0
        %2446 = vmatpush1.bf16.msra.mxu0 0
        %2447 = vmatprep.subr.bf16.mxu0 0
        %2448 = vmatpush1.bf16.msra.mxu0 0
        %2449 = vmatprep.subr.bf16.mxu0 0
        %2450 = vmatpush1.bf16.msra.mxu0 0
        %2451 = vmatprep.subr.bf16.mxu0 0
        %2452 = vmatpush1.bf16.msra.mxu0 0
        %2453 = vmatprep.subr.bf16.mxu0 0
        %2454 = vmatpush1.bf16.msra.mxu0 0
        %2455 = vmatprep.subr.bf16.mxu0 0
        %2456 = vmatpush1.bf16.msra.mxu0 0
        %2457 = vmatprep.subr.bf16.mxu0 0
        %2458 = vmatpush1.bf16.msra.mxu0 0
        %2459 = vmatprep.subr.bf16.mxu0 %v2390
        %2460 = vmatpush1.bf16.msra.mxu0 %v2387
        %2461 = vmatprep.subr.bf16.mxu0 0
        %2462 = vmatpush2.bf16.msra.mxu0 0
        %2463 = vmatprep.subr.bf16.mxu0 0
        %2464 = vmatpush2.bf16.msra.mxu0 0
        %2465 = vmatprep.subr.bf16.mxu0 0
        %2466 = vmatpush2.bf16.msra.mxu0 0
        %2467 = vmatprep.subr.bf16.mxu0 0
        %2468 = vmatpush2.bf16.msra.mxu0 0
        %2469 = vmatprep.subr.bf16.mxu0 0
        %2470 = vmatpush2.bf16.msra.mxu0 0
        %2471 = vmatprep.subr.bf16.mxu0 0
        %2472 = vmatpush2.bf16.msra.mxu0 0
        %2473 = vmatprep.subr.bf16.mxu0 0
        %2474 = vmatpush2.bf16.msra.mxu0 0
        %2475 = vmatprep.subr.bf16.mxu0 0
        %2476 = vmatpush2.bf16.msra.mxu0 0
        %2477 = vmatprep.mubr.bf16.mxu0 0
        %2478 = vmatmul.mubr.bf16.gmra.mxu0 %v2374
        %v2479 = vpop.f32.mrf.mxu0
        %v2480 = vadd.f32 0.0, %v2479
        %v2481 = vpop.f32.mrf.mxu0
        %v2482 = vadd.f32 0.0, %v2481
        %v2483 = vpop.f32.mrf.mxu0
        %v2484 = vadd.f32 0.0, %v2483
        %v2485 = vpop.f32.mrf.mxu0
        %v2486 = vadd.f32 0.0, %v2485
        %2487 = vmatprep.mubr.bf16.mxu0 0
        %2488 = vmatmul.mubr.bf16.gmra.mxu0 %v2377
        %v2489 = vpop.f32.mrf.mxu0
        %v2490 = vadd.f32 0.0, %v2489
        %v2491 = vpop.f32.mrf.mxu0
        %v2492 = vadd.f32 0.0, %v2491
        %v2493 = vpop.f32.mrf.mxu0
        %v2494 = vadd.f32 0.0, %v2493
        %v2495 = vpop.f32.mrf.mxu0
        %v2496 = vadd.f32 0.0, %v2495
        %2497 = vdwg.mxu0
        %v2498 = vmul.f32 %v1830, %v2427
        %v2499 = vmul.f32 %v1831, %v2429
        %v2500 = vmul.f32 %v1832, %v2480
        %v2501 = vmul.f32 %v1833, %v2482
        %v2502 = vmul.f32 %v1834, %v2431
        %v2503 = vmul.f32 %v1835, %v2433
        %v2504 = vmul.f32 %v1836, %v2484
        %v2505 = vmul.f32 %v1837, %v2486
        %v2506 = vmul.f32 %v1838, %v2437
        %v2507 = vmul.f32 %v1839, %v2439
        %v2508 = vmul.f32 %v1840, %v2490
        %v2509 = vmul.f32 %v1841, %v2492
        %v2510 = vmul.f32 %v1842, %v2441
        %v2511 = vmul.f32 %v1843, %v2443
        %v2512 = vmul.f32 %v1844, %v2494
        %v2513 = vmul.f32 %v1845, %v2496
        %v2514 = vld [vmem:[%s10] sm:$0xf]
        %v2515 = vld [vmem:[%s10 + $0x4] sm:$0xf]
        %v2516 = vpack.c.bf16 %v2502, %v2498
        %v2517 = vpack.c.bf16 %v2503, %v2499
        %v2518 = vpack.c.bf16 %v2504, %v2500
        %v2519 = vpack.c.bf16 %v2505, %v2501
        %v2520 = vpack.c.bf16 %v2510, %v2506
        %v2521 = vpack.c.bf16 %v2511, %v2507
        %v2522 = vpack.c.bf16 %v2512, %v2508
        %v2523 = vpack.c.bf16 %v2513, %v2509
        %v2524 = vld [vmem:[%s11] sm:$0xff]
        %v2525 = vld [vmem:[%s11 + $0x8] sm:$0xff]
        %2527 = vset.pattern.permute.xlu0 0
        %2528 = vperm.xlu0 %2527, %v2524
        %v2529 = vpop.permute.xlu0 %2528
        %2532 = vset.pattern.permute.xlu0 0
        %2533 = vperm.xlu0 %2532, %v2525
        %v2534 = vpop.permute.xlu0 %2533
        %v2538 = vunpack.c.l.b16 %v2514
        %v2539 = vunpack.c.l.b16 %v2515
        %v2540 = vpack.c.b16 %v2539, %v2538
        %v2542 = vsel %vm2211, %v2540, 0
        %2544 = vmatprep.subr.bf16.mxu0 0
        %2545 = vmatpush1.bf16.msra.mxu0 0
        %2546 = vmatprep.subr.bf16.mxu0 0
        %2547 = vmatpush1.bf16.msra.mxu0 0
        %2548 = vmatprep.subr.bf16.mxu0 0
        %2549 = vmatpush1.bf16.msra.mxu0 0
        %2550 = vmatprep.subr.bf16.mxu0 0
        %2551 = vmatpush1.bf16.msra.mxu0 0
        %2552 = vmatprep.subr.bf16.mxu0 0
        %2553 = vmatpush1.bf16.msra.mxu0 0
        %2554 = vmatprep.subr.bf16.mxu0 0
        %2555 = vmatpush1.bf16.msra.mxu0 0
        %2556 = vmatprep.subr.bf16.mxu0 %v2521
        %2557 = vmatpush1.bf16.msra.mxu0 %v2520
        %2558 = vmatprep.subr.bf16.mxu0 %v2517
        %2559 = vmatpush1.bf16.msra.mxu0 %v2516
        %2560 = vmatprep.subr.bf16.mxu0 0
        %2561 = vmatpush2.bf16.msra.mxu0 0
        %2562 = vmatprep.subr.bf16.mxu0 0
        %2563 = vmatpush2.bf16.msra.mxu0 0
        %2564 = vmatprep.subr.bf16.mxu0 0
        %2565 = vmatpush2.bf16.msra.mxu0 0
        %2566 = vmatprep.subr.bf16.mxu0 0
        %2567 = vmatpush2.bf16.msra.mxu0 0
        %2568 = vmatprep.subr.bf16.mxu0 0
        %2569 = vmatpush2.bf16.msra.mxu0 0
        %2570 = vmatprep.subr.bf16.mxu0 0
        %2571 = vmatpush2.bf16.msra.mxu0 0
        %2572 = vmatprep.subr.bf16.mxu0 0
        %2573 = vmatpush2.bf16.msra.mxu0 0
        %2574 = vmatprep.subr.bf16.mxu0 0
        %2575 = vmatpush2.bf16.msra.mxu0 0
        %2576 = vmatprep.mubr.bf16.mxu0 0
        %2577 = vmatmul.mubr.bf16.gmra.mxu0 %v2542
        %v2578 = vpop.f32.mrf.mxu0
        %v2579 = vadd.f32 %v2529, %v2578
        %v2580 = vpop.f32.mrf.mxu0
        %v2581 = vadd.f32 %v2529, %v2580
        %v2582 = vpop.f32.mrf.mxu0
        %v2583 = vadd.f32 %v2534, %v2582
        %v2584 = vpop.f32.mrf.mxu0
        %v2585 = vadd.f32 %v2534, %v2584
        %2586 = vdwg.mxu0
        %2587 = vmatprep.subr.bf16.mxu0 0
        %2588 = vmatpush1.bf16.msra.mxu0 0
        %2589 = vmatprep.subr.bf16.mxu0 0
        %2590 = vmatpush1.bf16.msra.mxu0 0
        %2591 = vmatprep.subr.bf16.mxu0 0
        %2592 = vmatpush1.bf16.msra.mxu0 0
        %2593 = vmatprep.subr.bf16.mxu0 0
        %2594 = vmatpush1.bf16.msra.mxu0 0
        %2595 = vmatprep.subr.bf16.mxu0 0
        %2596 = vmatpush1.bf16.msra.mxu0 0
        %2597 = vmatprep.subr.bf16.mxu0 0
        %2598 = vmatpush1.bf16.msra.mxu0 0
        %2599 = vmatprep.subr.bf16.mxu0 %v2523
        %2600 = vmatpush1.bf16.msra.mxu0 %v2522
        %2601 = vmatprep.subr.bf16.mxu0 %v2519
        %2602 = vmatpush1.bf16.msra.mxu0 %v2518
        %2603 = vmatprep.subr.bf16.mxu0 0
        %2604 = vmatpush2.bf16.msra.mxu0 0
        %2605 = vmatprep.subr.bf16.mxu0 0
        %2606 = vmatpush2.bf16.msra.mxu0 0
        %2607 = vmatprep.subr.bf16.mxu0 0
        %2608 = vmatpush2.bf16.msra.mxu0 0
        %2609 = vmatprep.subr.bf16.mxu0 0
        %2610 = vmatpush2.bf16.msra.mxu0 0
        %2611 = vmatprep.subr.bf16.mxu0 0
        %2612 = vmatpush2.bf16.msra.mxu0 0
        %2613 = vmatprep.subr.bf16.mxu0 0
        %2614 = vmatpush2.bf16.msra.mxu0 0
        %2615 = vmatprep.subr.bf16.mxu0 0
        %2616 = vmatpush2.bf16.msra.mxu0 0
        %2617 = vmatprep.subr.bf16.mxu0 0
        %2618 = vmatpush2.bf16.msra.mxu0 0
        %2619 = vmatprep.mubr.bf16.mxu0 0
        %2620 = vmatmul.mubr.bf16.gmra.mxu0 %v2542
        %v2621 = vpop.f32.mrf.mxu0
        %v2622 = vadd.f32 %v2529, %v2621
        %v2623 = vpop.f32.mrf.mxu0
        %v2624 = vadd.f32 %v2529, %v2623
        %v2625 = vpop.f32.mrf.mxu0
        %v2626 = vadd.f32 %v2534, %v2625
        %v2627 = vpop.f32.mrf.mxu0
        %v2628 = vadd.f32 %v2534, %v2627
        %2629 = vdwg.mxu0
        %v2630 = vadd.f32 %v2579, %v449
        %v2631 = vadd.f32 %v2581, %v450
        %v2632 = vadd.f32 %v2622, %v451
        %v2633 = vadd.f32 %v2624, %v452
        %v2634 = vadd.f32 %v2583, %v453
        %v2635 = vadd.f32 %v2585, %v454
        %v2636 = vadd.f32 %v2626, %v455
        %v2637 = vadd.f32 %v2628, %v456
        %2638 = vst [vmem:[%s445] sm:$0xff] %v2630
        %2639 = vst [vmem:[%s445 + $0x8] sm:$0xff] %v2631
        %2640 = vst [vmem:[%s445 + $0x10] sm:$0xff] %v2632
        %2641 = vst [vmem:[%s445 + $0x18] sm:$0xff] %v2633
        %2642 = vst [vmem:[%s445 + $0x20] sm:$0xff] %v2634
        %2643 = vst [vmem:[%s445 + $0x28] sm:$0xff] %v2635
        %2644 = vst [vmem:[%s445 + $0x30] sm:$0xff] %v2636
        %2645 = vst [vmem:[%s445 + $0x38] sm:$0xff] %v2637
        %s2646 = sand.u32 %s291, 1
        %s2647 = scalar_lea.sflag [#allocation4], %s2646
        %s2648 = sand.u32 %s291, 1
        %s2649 = smul.addr %s2648, 64
        %s2650 = scalar_lea.vmem [#allocation3], %s2649
        // Predicated region
        $region92: #{tpu_custom_call.1} parent=86 // pred_check
          %p2651 = pneg %p301
        $region93: #{tpu_custom_call.1} parent=86 // pred_check_branch
          %2653 = sbr.rel (%p2651) target = $region95
        $region94: #{tpu_custom_call.1} parent=86 // pred_region
          %s2654 = smul.u32 4, %s26
          %s2656 = ssub.s32 1024, 1024
          %2657 = vsyncadd %s2647, %s2656
          %s2658 = smul.addr %s2654, 128
          %s2659 = scalar_lea.hbm %s12, %s2658
          %s2660 = sshll.u32 %s2650, 4
          %s2661 = int_to_ptr.vmem [resolvable:$true] %s2660
          %2666 = dma.vmem_to_hbm [thread:$0]  %s2661, 1024, %s2659, %s2647, 512, 1024, 32
        $region95: #{tpu_custom_call.1} parent=86 // pred_fallthru
          _
      $region87: #{tpu_custom_call.1} parent=5 // pred_fallthru
        _
      %p2667 = scmp.le.s32.totalorder 2, %s21
      // Predicated region
      $region96: #{tpu_custom_call.1} parent=5 // pred_check
        %p2668 = pneg %p2667
      $region97: #{tpu_custom_call.1} parent=5 // pred_check_branch
        %2670 = sbr.rel (%p2668) target = $region99
      $region98: #{tpu_custom_call.1} parent=5 // pred_region
        %s2671 = ssub.s32 %s21, 2
        // Predicated region
        $region100: #{tpu_custom_call.1} parent=98 // pred_check
          %p2672 = pneg %p307
        $region101: #{tpu_custom_call.1} parent=98 // pred_check_branch
          %2674 = sbr.rel (%p2672) target = $region103
        $region102: #{tpu_custom_call.1} parent=98 // pred_region
          %s2675 = sand.u32 %s292, 1
          %s2676 = scalar_lea.sflag [#allocation4], %s2675
          %s2677 = sand.u32 %s292, 1
          %s2678 = smul.addr %s2677, 64
          %s2679 = scalar_lea.vmem [#allocation3], %s2678
          %2680 = dma.done %s2676, 1024
        $region103: #{tpu_custom_call.1} parent=98 // pred_fallthru
          _
      $region99: #{tpu_custom_call.1} parent=5 // pred_fallthru
        _
    $region6: #{tpu_custom_call.1} parent=1 // loop_footer
      %s25 = sadd.s32 1, %s21
    $region7: #{tpu_custom_call.1} parent=1 // loop_footer_branch
      %20 = sbr.rel target = $region3
    $region8: #{tpu_custom_call.1} parent=1 // loop_exit
      _
    %2681 = vsyncpa [#allocation4], 1
    %s2682 = scalar_lea.sflag [#allocation4], 1
    %2683 = vsyncpa %s2682, 1

</llo_original>
